<compile_context>
chip_gen: v5e
topology: v5e:2x2
jax: 0.10.0
libtpu: 0.0.40
codegen_flags: <defaults>
</compile_context>

<pallas_src>
import jax
import jax.numpy as jnp
import numpy as np
from jax.experimental import pallas as pl
from jax.experimental.pallas import tpu as pltpu

# ----------------------------- model config --------------------------------
D_PTS = 3
D_NRM = 3
D_GEO = D_PTS + D_NRM                  # 6   (points ++ normals)
KPS = 24
COND_DIM = KPS * 3                     # 72  (flattened body pose)
DIM_COND_EMBED = 8                     # lin_pose output
DIM_FRAME_ENCODING = 32                # cam latent code
FEATURE_SIZE = 256                     # feature_vectors width
HIDDEN = (256, 256)
D_OUT = 3

IN0 = D_GEO + DIM_COND_EMBED + DIM_FRAME_ENCODING + FEATURE_SIZE   # 302
_PE_LO, _PE_HI = D_GEO, D_GEO + DIM_COND_EMBED                     # 6, 14
_CAM_LO, _CAM_HI = _PE_HI, _PE_HI + DIM_FRAME_ENCODING             # 14, 46


# ------------------------------ Pallas kernel ------------------------------
def rendering_kernel(geo_ref, feat_ref,
                     w0g_ref, w0f_ref, b0_ref,
                     w1_ref, b1_ref,
                     w2_ref, b2_ref,
                     out_ref):
    # layer 0: h = relu(feat @ W0_feat + geo @ W0_geo + b0_eff)
    # (b0_eff already holds lin_pose(body_pose) @ W0_pose + cam @ W0_cam + b0)
    h = jnp.dot(feat_ref[...].astype(jnp.bfloat16), w0f_ref[...],
                preferred_element_type=jnp.float32)
    h += jnp.dot(geo_ref[...].astype(jnp.bfloat16), w0g_ref[...],
                 preferred_element_type=jnp.float32)
    h = jnp.maximum(h + b0_ref[...], 0.0)
    # layer 1 + ReLU (bf16 MXU operands, f32 accumulation, f32 elementwise)
    h = jnp.dot(h.astype(jnp.bfloat16), w1_ref[...],
                preferred_element_type=jnp.float32) + b1_ref[...]
    h = jnp.maximum(h, 0.0)
    # output layer + sigmoid (exp and reciprocal both go to the EUP slot)
    y = jnp.dot(h.astype(jnp.bfloat16), w2_ref[...],
                preferred_element_type=jnp.float32) + b2_ref[...]
    out_ref[...] = pl.reciprocal(1.0 + jnp.exp(-y), approx=True).astype(out_ref.dtype)


# ------------------------------- wrapper ------------------------------------
def _round_down(a, b):
    return (a // b) * b


def renderingnet_pallas(points, normals, view_dirs, body_pose, feature_vectors,
                        cam_latent_code, prepped, *, max_tile_m=4096):
    """RenderingNet 'pose'-mode forward. Returns (rgb[N,3] bf16, None)."""
    del view_dirs  # 'pose' mode only uses view_dirs for its leading dim (== N)
    n = points.shape[0]

    # --- fold the per-call row-constants into the layer-0 bias (f32, exact) ---
    pose_embed = body_pose.reshape(1, COND_DIM) @ prepped["wp"] + prepped["bp"]
    b0_eff = (pose_embed @ prepped["w0_pe"]
              + cam_latent_code.reshape(1, DIM_FRAME_ENCODING) @ prepped["w0_cam"]
              + prepped["b0"])                                     # [1, 256] f32

    # tiny per-row geometry input; feature_vectors goes to the kernel untouched
    geo = jnp.concatenate([points, normals], axis=-1)              # [N, 6] f32

    # --- tiling: large tiles, but keep >=4 grid steps (2 v7x TCs x >=2 steps) ---
    tile_m = max(256, min(max_tile_m, _round_down(pl.cdiv(n, 4), 256)))
    grid_m = pl.cdiv(n, tile_m)   # ragged last tile handled by Pallas (no jnp.pad)

    const = lambda shape: pl.BlockSpec(shape, lambda i: (0,) * len(shape))

    weight_elems = (D_GEO * HIDDEN[0] + FEATURE_SIZE * HIDDEN[0]
                    + HIDDEN[0] * HIDDEN[1] + HIDDEN[1] * D_OUT)
    cost = pl.CostEstimate(
        flops=2 * n * weight_elems,
        transcendentals=2 * n * D_OUT,
        bytes_accessed=(n * (D_GEO * 4 + FEATURE_SIZE * 4 + D_OUT * 2)
                        + 2 * weight_elems
                        + 4 * (HIDDEN[0] + HIDDEN[1] + D_OUT)))

    rgb = pl.pallas_call(
        rendering_kernel,
        out_shape=jax.ShapeDtypeStruct((n, D_OUT), jnp.bfloat16),
        grid_spec=pltpu.PrefetchScalarGridSpec(
            num_scalar_prefetch=0,
            grid=(grid_m,),
            in_specs=[
                pl.BlockSpec((tile_m, D_GEO), lambda i: (i, 0)),
                pl.BlockSpec((tile_m, FEATURE_SIZE), lambda i: (i, 0)),
                const((D_GEO, HIDDEN[0])),
                const((FEATURE_SIZE, HIDDEN[0])),
                const((1, HIDDEN[0])),
                const((HIDDEN[0], HIDDEN[1])),
                const((1, HIDDEN[1])),
                const((HIDDEN[1], D_OUT)),
                const((1, D_OUT)),
            ],
            out_specs=pl.BlockSpec((tile_m, D_OUT), lambda i: (i, 0)),
        ),
        compiler_params=pltpu.CompilerParams(
            dimension_semantics=("parallel",)),
        cost_estimate=cost,
    )(geo, feature_vectors,
      prepped["w0_geo"], prepped["w0_feat"], b0_eff,
      prepped["w1"], prepped["b1"], prepped["w2"], prepped["b2"])

    return rgb, None      # sem head disabled (num_sem=0)


# ------------------------- parameter initialization ------------------------
def xavier_uniform(key, fan_in, fan_out):
    bound = float(np.sqrt(6.0 / (fan_in + fan_out)))
    # stored as [in, out] (transpose of the PyTorch nn.Linear weight layout)
    return jax.random.uniform(key, (fan_in, fan_out), jnp.float32,
                              minval=-bound, maxval=bound)


def init_params(key):
    # NOTE: PyTorch uses kaiming-uniform-ish defaults for these nn.Linear
    # layers; the init scheme does not affect kernel correctness.
    ks = jax.random.split(key, 8)
    small = lambda k, m: jax.random.uniform(k, (m,), jnp.float32, -0.1, 0.1)
    return {
        "wp": xavier_uniform(ks[0], COND_DIM, DIM_COND_EMBED), "bp": small(ks[1], DIM_COND_EMBED),
        "w0": xavier_uniform(ks[2], IN0, HIDDEN[0]),           "b0": small(ks[3], HIDDEN[0]),
        "w1": xavier_uniform(ks[4], HIDDEN[0], HIDDEN[1]),     "b1": small(ks[5], HIDDEN[1]),
        "w2": xavier_uniform(ks[6], HIDDEN[1], D_OUT),         "b2": small(ks[7], D_OUT),
    }


def prepare_params(p):
    """Split lin0 by input group: bf16 weights for the row-dependent matmuls,
    f32 pieces for the per-call constant fold done in the wrapper."""
    w0 = p["w0"]
    bf = jnp.bfloat16
    return {
        # row-dependent matmul weights (bf16, kept resident in VMEM)
        "w0_geo": w0[:D_GEO].astype(bf),             # [6, 256]
        "w0_feat": w0[_CAM_HI:].astype(bf),          # [256, 256] exact K=256
        "w1": p["w1"].astype(bf),                    # [256, 256]
        "w2": p["w2"].astype(bf),                    # [256, 3]
        # f32 pieces used by the wrapper-side constant fold (exact)
        "wp": p["wp"], "bp": p["bp"].reshape(1, -1),
        "w0_pe": w0[_PE_LO:_PE_HI],                  # [8, 256]
        "w0_cam": w0[_CAM_LO:_CAM_HI],               # [32, 256]
        "b0": p["b0"].reshape(1, -1),
        # f32 biases added after f32 accumulation in the kernel
        "b1": p["b1"].reshape(1, -1),
        "b2": p["b2"].reshape(1, -1),
    }


# ------------------------------ pure-JAX ref --------------------------------
def renderingnet_ref(points, normals, view_dirs, body_pose, feature_vectors,
                     cam_latent_code, p):
    del view_dirs
    n = points.shape[0]
    bp = jnp.broadcast_to(body_pose.reshape(1, COND_DIM), (n, COND_DIM))
    pose_embed = bp @ p["wp"] + p["bp"]
    cam = jnp.broadcast_to(cam_latent_code.reshape(1, DIM_FRAME_ENCODING),
                           (n, DIM_FRAME_ENCODING))
    x = jnp.concatenate([points, normals, pose_embed, cam, feature_vectors], axis=-1)
    x = jnp.maximum(x @ p["w0"] + p["b0"], 0.0)
    x = jnp.maximum(x @ p["w1"] + p["b1"], 0.0)
    x = x @ p["w2"] + p["b2"]
    return jax.nn.sigmoid(x), None    # (rgb, sem) with num_sem=0


if __name__ == "__main__":
    key = jax.random.PRNGKey(0)
    kparam, kpts, knrm, kvd, kpose, kfeat, kcam = jax.random.split(key, 7)

    params = init_params(kparam)
    prepped = prepare_params(params)

    N = 1023  # not a multiple of the tile -> exercises the ragged last block
    points = jax.random.normal(kpts, (N, D_PTS), jnp.float32)
    normals = jax.random.normal(knrm, (N, D_NRM), jnp.float32)
    view_dirs = jax.random.normal(kvd, (N, 3), jnp.float32)
    body_pose = 0.1 * jax.random.normal(kpose, (1, COND_DIM), jnp.float32)
    feature_vectors = jax.random.normal(kfeat, (N, FEATURE_SIZE), jnp.float32)
    cam_latent_code = jax.random.normal(kcam, (1, DIM_FRAME_ENCODING), jnp.float32)

    fwd = jax.jit(renderingnet_pallas)
    rgb, sem = fwd(points, normals, view_dirs, body_pose, feature_vectors,
                   cam_latent_code, prepped)
    rgb = jax.block_until_ready(rgb)

    rgb_ref, _ = renderingnet_ref(points, normals, view_dirs, body_pose,
                                  feature_vectors, cam_latent_code, params)
    assert rgb.shape == (N, D_OUT) and sem is None
    # tolerance accounts for bf16 weights/activations and the bf16 rgb output
    # (f32 accumulation and f32 bias fold keep the error well inside 2e-2)
    np.testing.assert_allclose(np.asarray(rgb.astype(jnp.float32)),
                               np.asarray(rgb_ref), rtol=2e-2, atol=2e-2)
    print("KERNEL_OK")
</pallas_src>

<mosaic_0001>
module attributes {stable_mosaic.version = 11 : i64} {
  func.func @rendering_kernel(%arg0: i32, %arg1: memref<256x6xf32, #tpu.memory_space<vmem>>, %arg2: memref<256x256xf32, #tpu.memory_space<vmem>>, %arg3: memref<6x256xbf16, #tpu.memory_space<vmem>>, %arg4: memref<256x256xbf16, #tpu.memory_space<vmem>>, %arg5: memref<1x256xf32, #tpu.memory_space<vmem>>, %arg6: memref<256x256xbf16, #tpu.memory_space<vmem>>, %arg7: memref<1x256xf32, #tpu.memory_space<vmem>>, %arg8: memref<256x3xbf16, #tpu.memory_space<vmem>>, %arg9: memref<1x3xf32, #tpu.memory_space<vmem>>, %arg10: memref<256x3xbf16, #tpu.memory_space<vmem>>) attributes {dimension_semantics = [#tpu.dimension_semantics<parallel>], iteration_bounds = array<i64: 4>, scalar_prefetch = 0 : i64, scratch_operands = 0 : i64, tpu.core_type = #tpu.core_type<tc>, window_params = [{transform_indices = @transform_0, window_bounds = array<i64: 256, 6>}, {transform_indices = @transform_1, window_bounds = array<i64: 256, 256>}, {pipeline_mode = #tpu.pipeline_mode<synchronous>, transform_indices = @transform_2, window_bounds = array<i64: 6, 256>}, {pipeline_mode = #tpu.pipeline_mode<synchronous>, transform_indices = @transform_3, window_bounds = array<i64: 256, 256>}, {pipeline_mode = #tpu.pipeline_mode<synchronous>, transform_indices = @transform_4, window_bounds = array<i64: 1, 256>}, {pipeline_mode = #tpu.pipeline_mode<synchronous>, transform_indices = @transform_5, window_bounds = array<i64: 256, 256>}, {pipeline_mode = #tpu.pipeline_mode<synchronous>, transform_indices = @transform_6, window_bounds = array<i64: 1, 256>}, {pipeline_mode = #tpu.pipeline_mode<synchronous>, transform_indices = @transform_7, window_bounds = array<i64: 256, 3>}, {pipeline_mode = #tpu.pipeline_mode<synchronous>, transform_indices = @transform_8, window_bounds = array<i64: 1, 3>}, {transform_indices = @transform_9, window_bounds = array<i64: 256, 3>}]} {
    %c0 = arith.constant 0 : index
    %c0_0 = arith.constant 0 : index
    %0 = vector.load %arg2[%c0, %c0_0] : memref<256x256xf32, #tpu.memory_space<vmem>>, vector<256x256xf32>
    %1 = arith.truncf %0 : vector<256x256xf32> to vector<256x256xbf16>
    %c0_1 = arith.constant 0 : index
    %c0_2 = arith.constant 0 : index
    %2 = vector.load %arg4[%c0_1, %c0_2] : memref<256x256xbf16, #tpu.memory_space<vmem>>, vector<256x256xbf16>
    %cst = arith.constant dense<0.000000e+00> : vector<256x256xf32>
    %3 = tpu.matmul %1, %2, %cst {dimension_numbers = #tpu.dot_dimension_numbers<[1], [0], [0], [1], [0, 0, 1, 1], [], []>} : vector<256x256xbf16>, vector<256x256xbf16>, vector<256x256xf32> -> vector<256x256xf32>
    %c0_3 = arith.constant 0 : index
    %c0_4 = arith.constant 0 : index
    %4 = vector.load %arg1[%c0_3, %c0_4] : memref<256x6xf32, #tpu.memory_space<vmem>>, vector<256x6xf32>
    %5 = arith.truncf %4 : vector<256x6xf32> to vector<256x6xbf16>
    %c0_5 = arith.constant 0 : index
    %c0_6 = arith.constant 0 : index
    %6 = vector.load %arg3[%c0_5, %c0_6] : memref<6x256xbf16, #tpu.memory_space<vmem>>, vector<6x256xbf16>
    %cst_7 = arith.constant dense<0.000000e+00> : vector<256x256xf32>
    %7 = tpu.matmul %5, %6, %cst_7 {dimension_numbers = #tpu.dot_dimension_numbers<[1], [0], [0], [1], [0, 0, 1, 1], [], []>} : vector<256x6xbf16>, vector<6x256xbf16>, vector<256x256xf32> -> vector<256x256xf32>
    %8 = arith.addf %3, %7 : vector<256x256xf32>
    %c0_8 = arith.constant 0 : index
    %c0_9 = arith.constant 0 : index
    %9 = vector.load %arg5[%c0_8, %c0_9] : memref<1x256xf32, #tpu.memory_space<vmem>>, vector<1x256xf32>
    %10 = vector.broadcast %9 : vector<1x256xf32> to vector<256x256xf32>
    %11 = arith.addf %8, %10 : vector<256x256xf32>
    %cst_10 = arith.constant 0.000000e+00 : f32
    %12 = vector.broadcast %cst_10 : f32 to vector<256x256xf32>
    %13 = arith.maximumf %11, %12 : vector<256x256xf32>
    %14 = arith.truncf %13 : vector<256x256xf32> to vector<256x256xbf16>
    %c0_11 = arith.constant 0 : index
    %c0_12 = arith.constant 0 : index
    %15 = vector.load %arg6[%c0_11, %c0_12] : memref<256x256xbf16, #tpu.memory_space<vmem>>, vector<256x256xbf16>
    %cst_13 = arith.constant dense<0.000000e+00> : vector<256x256xf32>
    %16 = tpu.matmul %14, %15, %cst_13 {dimension_numbers = #tpu.dot_dimension_numbers<[1], [0], [0], [1], [0, 0, 1, 1], [], []>} : vector<256x256xbf16>, vector<256x256xbf16>, vector<256x256xf32> -> vector<256x256xf32>
    %c0_14 = arith.constant 0 : index
    %c0_15 = arith.constant 0 : index
    %17 = vector.load %arg7[%c0_14, %c0_15] : memref<1x256xf32, #tpu.memory_space<vmem>>, vector<1x256xf32>
    %18 = vector.broadcast %17 : vector<1x256xf32> to vector<256x256xf32>
    %19 = arith.addf %16, %18 : vector<256x256xf32>
    %cst_16 = arith.constant 0.000000e+00 : f32
    %20 = vector.broadcast %cst_16 : f32 to vector<256x256xf32>
    %21 = arith.maximumf %19, %20 : vector<256x256xf32>
    %22 = arith.truncf %21 : vector<256x256xf32> to vector<256x256xbf16>
    %c0_17 = arith.constant 0 : index
    %c0_18 = arith.constant 0 : index
    %23 = vector.load %arg8[%c0_17, %c0_18] : memref<256x3xbf16, #tpu.memory_space<vmem>>, vector<256x3xbf16>
    %cst_19 = arith.constant dense<0.000000e+00> : vector<256x3xf32>
    %24 = tpu.matmul %22, %23, %cst_19 {dimension_numbers = #tpu.dot_dimension_numbers<[1], [0], [0], [1], [0, 0, 1, 1], [], []>} : vector<256x256xbf16>, vector<256x3xbf16>, vector<256x3xf32> -> vector<256x3xf32>
    %c0_20 = arith.constant 0 : index
    %c0_21 = arith.constant 0 : index
    %25 = vector.load %arg9[%c0_20, %c0_21] : memref<1x3xf32, #tpu.memory_space<vmem>>, vector<1x3xf32>
    %26 = vector.broadcast %25 : vector<1x3xf32> to vector<256x3xf32>
    %27 = arith.addf %24, %26 : vector<256x3xf32>
    %cst_22 = arith.constant 0.000000e+00 : f32
    %28 = vector.broadcast %cst_22 : f32 to vector<256x3xf32>
    %29 = arith.subf %28, %27 : vector<256x3xf32>
    %30 = math.exp %29 : vector<256x3xf32>
    %cst_23 = arith.constant 1.000000e+00 : f32
    %31 = vector.broadcast %cst_23 : f32 to vector<256x3xf32>
    %32 = arith.addf %31, %30 : vector<256x3xf32>
    %33 = tpu.reciprocal %32 {approx = true} : vector<256x3xf32> -> vector<256x3xf32>
    %34 = arith.truncf %33 : vector<256x3xf32> to vector<256x3xbf16>
    %c0_24 = arith.constant 0 : index
    %c0_25 = arith.constant 0 : index
    %35 = vector.load %arg10[%c0_24, %c0_25] : memref<256x3xbf16, #tpu.memory_space<vmem>>, vector<256x3xbf16>
    tpu.vector_store %arg10[%c0_24, %c0_25], %34 {strides = array<i32>} : memref<256x3xbf16, #tpu.memory_space<vmem>>, vector<256x3xbf16>,
    return
  }
  func.func @transform_0(%arg0: i32) -> (i32, i32) {
    %c0_i32 = arith.constant 0 : i32
    %c0_i32_0 = arith.constant 0 : i32
    return %arg0, %c0_i32 : i32, i32
  }
  func.func @transform_1(%arg0: i32) -> (i32, i32) {
    %c0_i32 = arith.constant 0 : i32
    %c0_i32_0 = arith.constant 0 : i32
    return %arg0, %c0_i32 : i32, i32
  }
  func.func @transform_2(%arg0: i32) -> (i32, i32) {
    %c0_i32 = arith.constant 0 : i32
    %c0_i32_0 = arith.constant 0 : i32
    %c0_i32_1 = arith.constant 0 : i32
    return %c0_i32, %c0_i32_0 : i32, i32
  }
  func.func @transform_3(%arg0: i32) -> (i32, i32) {
    %c0_i32 = arith.constant 0 : i32
    %c0_i32_0 = arith.constant 0 : i32
    %c0_i32_1 = arith.constant 0 : i32
    return %c0_i32, %c0_i32_0 : i32, i32
  }
  func.func @transform_4(%arg0: i32) -> (i32, i32) {
    %c0_i32 = arith.constant 0 : i32
    %c0_i32_0 = arith.constant 0 : i32
    %c0_i32_1 = arith.constant 0 : i32
    return %c0_i32, %c0_i32_0 : i32, i32
  }
  func.func @transform_5(%arg0: i32) -> (i32, i32) {
    %c0_i32 = arith.constant 0 : i32
    %c0_i32_0 = arith.constant 0 : i32
    %c0_i32_1 = arith.constant 0 : i32
    return %c0_i32, %c0_i32_0 : i32, i32
  }
  func.func @transform_6(%arg0: i32) -> (i32, i32) {
    %c0_i32 = arith.constant 0 : i32
    %c0_i32_0 = arith.constant 0 : i32
    %c0_i32_1 = arith.constant 0 : i32
    return %c0_i32, %c0_i32_0 : i32, i32
  }
  func.func @transform_7(%arg0: i32) -> (i32, i32) {
    %c0_i32 = arith.constant 0 : i32
    %c0_i32_0 = arith.constant 0 : i32
    %c0_i32_1 = arith.constant 0 : i32
    return %c0_i32, %c0_i32_0 : i32, i32
  }
  func.func @transform_8(%arg0: i32) -> (i32, i32) {
    %c0_i32 = arith.constant 0 : i32
    %c0_i32_0 = arith.constant 0 : i32
    %c0_i32_1 = arith.constant 0 : i32
    return %c0_i32, %c0_i32_0 : i32, i32
  }
  func.func @transform_9(%arg0: i32) -> (i32, i32) {
    %c0_i32 = arith.constant 0 : i32
    %c0_i32_0 = arith.constant 0 : i32
    return %arg0, %c0_i32 : i32, i32
  }
}

</mosaic_0001>

<llo_original>
// kernel: renderingnet_pallas.1
$region0: #{renderingnet_pallas.1}
  #allocation0 [shape = 'u32[]', space=smem, size = 0x4, offset = 0x4, fixed_abs, tag = 'smem constant byte address 0x4 - core index']
  #allocation1 [shape = 'u32[72,128]{1,0:T(1,128)}', space=vmem, size = 0x9000, scoped, tag = 'internal scratch']
  %s0 = inlined_call_operand.vmem [shape: f32[1023,6], index: 0, kind: input, shape index: {}]
  %s1 = inlined_call_operand.hbm [shape: f32[1023,256], index: 1, kind: input, shape index: {}]
  %s2 = inlined_call_operand.vmem [shape: bf16[6,256], index: 2, kind: input, shape index: {}]
  %s3 = inlined_call_operand.vmem [shape: bf16[256,256], index: 3, kind: input, shape index: {}]
  %s4 = inlined_call_operand.vmem [shape: f32[1,256], index: 4, kind: input, shape index: {}]
  %s5 = inlined_call_operand.vmem [shape: bf16[256,256], index: 5, kind: input, shape index: {}]
  %s6 = inlined_call_operand.vmem [shape: f32[1,256], index: 6, kind: input, shape index: {}]
  %s7 = inlined_call_operand.vmem [shape: bf16[256,3], index: 7, kind: input, shape index: {}]
  %s8 = inlined_call_operand.vmem [shape: f32[1,3], index: 8, kind: input, shape index: {}]
  %s9 = inlined_call_operand.vmem [shape: bf16[1023,3], index: 9, kind: output, shape index: {}]
  %s10 = sld [smem:[#allocation0]]
  $region73: #{renderingnet_pallas.1} parent=0
    _
  %s12 = ssub.s32 1, %s10
  %s13 = scalar_select 0, %s12, %s10
  $region1: #{renderingnet_pallas.1} parent=0
    #allocation2 [shape = 'u8[524288]{0}', space=vmem, size = 0x80000, scoped, tag = 'input window, operand 1']
    #allocation3 [shape = 's32[2]{0}', space=sflag, size = 0x8, scoped, tag = 'scoped memory for renderingnet_pallas.1']
    %14 = vsyncpa [#allocation3], 0
    %s15 = scalar_lea.sflag [#allocation3], 1
    %16 = vsyncpa %s15, 0
    loop: start=0, step=1, limit=6
    $region2: #{renderingnet_pallas.1} parent=1 // loop_pre_header
      _
    $region3: #{renderingnet_pallas.1} parent=1 // loop_header
      %s18 = sphi 0, %s22
      %p19 = scmp.ge.s32.totalorder %s18, 6
      %s28 = sphi 0, %s30
      %s31 = sphi 0, %s28
      %s32 = sphi 0, %s31
      %s48 = sphi 0, %s32
      %s54 = sphi 0, %s56
      %s57 = sphi 0, %s54
      %s58 = sphi 0, %s57
      %s74 = sphi 0, %s58
      %s78 = sphi 0, %s78
      %s80 = sphi 0, %s78
      %s81 = sphi 0, %s80
      %s95 = sphi 0, %s81
      %s99 = sphi 0, %s99
      %s101 = sphi 0, %s99
      %s102 = sphi 0, %s101
      %s116 = sphi 0, %s102
      %s120 = sphi 0, %s120
      %s122 = sphi 0, %s120
      %s123 = sphi 0, %s122
      %s137 = sphi 0, %s123
      %s141 = sphi 0, %s141
      %s143 = sphi 0, %s141
      %s144 = sphi 0, %s143
      %s158 = sphi 0, %s144
      %s162 = sphi 0, %s162
      %s164 = sphi 0, %s162
      %s165 = sphi 0, %s164
      %s179 = sphi 0, %s165
      %s183 = sphi 0, %s183
      %s185 = sphi 0, %s183
      %s186 = sphi 0, %s185
      %s200 = sphi 0, %s186
      %s204 = sphi 0, %s204
      %s206 = sphi 0, %s204
      %s207 = sphi 0, %s206
      %s221 = sphi 0, %s207
      %s227 = sphi 0, %s229
      %s230 = sphi 0, %s227
      %s231 = sphi 0, %s230
      %s247 = sphi 0, %s231
    $region4: #{renderingnet_pallas.1} parent=1 // loop_header_branch
      %21 = sbr.rel (%p19) target = $region8
    $region5: #{renderingnet_pallas.1} parent=1 // loop_body
      %s23 = ssub.s32 %s18, 1
      %s24 = ssub.s32 %s18, 2
      %s25 = sadd.s32 %s18, 1
      %s26 = ssub.s32 %s18, %s25
      %p27 = scmp.eq.s32.totalorder %s26, 0
      %s29 = sadd.s32 %s28, 1
      %s30 = scalar_select %p27, %s28, %s29
      %p33 = pneg %p27
      %p34 = scmp.eq.s32.totalorder %s18, 3
      %p35 = por %p33, %p34
      %p36 = scmp.ne.s32.totalorder %s28, %s31
      %p37 = scmp.eq.s32.totalorder %s18, 0
      %p38 = por %p36, %p37
      %p39 = scmp.ne.s32.totalorder %s28, %s31
      %p40 = scmp.eq.s32.totalorder %s23, 3
      %p41 = por %p39, %p40
      %p42 = scmp.ne.s32.totalorder %s31, %s32
      %p43 = scmp.eq.s32.totalorder %s23, 0
      %p44 = por %p42, %p43
      %p45 = scmp.ne.s32.totalorder %s31, %s32
      %p46 = scmp.eq.s32.totalorder %s24, 3
      %p47 = por %p45, %p46
      %p49 = scmp.ne.s32.totalorder %s32, %s48
      %p50 = scmp.eq.s32.totalorder %s24, 0
      %p51 = por %p49, %p50
      %s52 = ssub.s32 %s18, %s25
      %p53 = scmp.eq.s32.totalorder %s52, 0
      %s55 = sadd.s32 %s54, 1
      %s56 = scalar_select %p53, %s54, %s55
      %p59 = pneg %p53
      %p60 = scmp.eq.s32.totalorder %s18, 3
      %p61 = por %p59, %p60
      %p62 = scmp.ne.s32.totalorder %s54, %s57
      %p63 = scmp.eq.s32.totalorder %s18, 0
      %p64 = por %p62, %p63
      %p65 = scmp.ne.s32.totalorder %s54, %s57
      %p66 = scmp.eq.s32.totalorder %s23, 3
      %p67 = por %p65, %p66
      %p68 = scmp.ne.s32.totalorder %s57, %s58
      %p69 = scmp.eq.s32.totalorder %s23, 0
      %p70 = por %p68, %p69
      %p71 = scmp.ne.s32.totalorder %s57, %s58
      %p72 = scmp.eq.s32.totalorder %s24, 3
      %p73 = por %p71, %p72
      %p75 = scmp.ne.s32.totalorder %s58, %s74
      %p76 = scmp.eq.s32.totalorder %s24, 0
      %p77 = por %p75, %p76
      %s79 = sadd.s32 %s78, 1
      %p82 = scmp.eq.s32.totalorder %s18, 3
      %p83 = scmp.ne.s32.totalorder %s78, %s80
      %p84 = scmp.eq.s32.totalorder %s18, 0
      %p85 = por %p83, %p84
      %p86 = scmp.ne.s32.totalorder %s78, %s80
      %p87 = scmp.eq.s32.totalorder %s23, 3
      %p88 = por %p86, %p87
      %p89 = scmp.ne.s32.totalorder %s80, %s81
      %p90 = scmp.eq.s32.totalorder %s23, 0
      %p91 = por %p89, %p90
      %p92 = scmp.ne.s32.totalorder %s80, %s81
      %p93 = scmp.eq.s32.totalorder %s24, 3
      %p94 = por %p92, %p93
      %p96 = scmp.ne.s32.totalorder %s81, %s95
      %p97 = scmp.eq.s32.totalorder %s24, 0
      %p98 = por %p96, %p97
      %s100 = sadd.s32 %s99, 1
      %p103 = scmp.eq.s32.totalorder %s18, 3
      %p104 = scmp.ne.s32.totalorder %s99, %s101
      %p105 = scmp.eq.s32.totalorder %s18, 0
      %p106 = por %p104, %p105
      %p107 = scmp.ne.s32.totalorder %s99, %s101
      %p108 = scmp.eq.s32.totalorder %s23, 3
      %p109 = por %p107, %p108
      %p110 = scmp.ne.s32.totalorder %s101, %s102
      %p111 = scmp.eq.s32.totalorder %s23, 0
      %p112 = por %p110, %p111
      %p113 = scmp.ne.s32.totalorder %s101, %s102
      %p114 = scmp.eq.s32.totalorder %s24, 3
      %p115 = por %p113, %p114
      %p117 = scmp.ne.s32.totalorder %s102, %s116
      %p118 = scmp.eq.s32.totalorder %s24, 0
      %p119 = por %p117, %p118
      %s121 = sadd.s32 %s120, 1
      %p124 = scmp.eq.s32.totalorder %s18, 3
      %p125 = scmp.ne.s32.totalorder %s120, %s122
      %p126 = scmp.eq.s32.totalorder %s18, 0
      %p127 = por %p125, %p126
      %p128 = scmp.ne.s32.totalorder %s120, %s122
      %p129 = scmp.eq.s32.totalorder %s23, 3
      %p130 = por %p128, %p129
      %p131 = scmp.ne.s32.totalorder %s122, %s123
      %p132 = scmp.eq.s32.totalorder %s23, 0
      %p133 = por %p131, %p132
      %p134 = scmp.ne.s32.totalorder %s122, %s123
      %p135 = scmp.eq.s32.totalorder %s24, 3
      %p136 = por %p134, %p135
      %p138 = scmp.ne.s32.totalorder %s123, %s137
      %p139 = scmp.eq.s32.totalorder %s24, 0
      %p140 = por %p138, %p139
      %s142 = sadd.s32 %s141, 1
      %p145 = scmp.eq.s32.totalorder %s18, 3
      %p146 = scmp.ne.s32.totalorder %s141, %s143
      %p147 = scmp.eq.s32.totalorder %s18, 0
      %p148 = por %p146, %p147
      %p149 = scmp.ne.s32.totalorder %s141, %s143
      %p150 = scmp.eq.s32.totalorder %s23, 3
      %p151 = por %p149, %p150
      %p152 = scmp.ne.s32.totalorder %s143, %s144
      %p153 = scmp.eq.s32.totalorder %s23, 0
      %p154 = por %p152, %p153
      %p155 = scmp.ne.s32.totalorder %s143, %s144
      %p156 = scmp.eq.s32.totalorder %s24, 3
      %p157 = por %p155, %p156
      %p159 = scmp.ne.s32.totalorder %s144, %s158
      %p160 = scmp.eq.s32.totalorder %s24, 0
      %p161 = por %p159, %p160
      %s163 = sadd.s32 %s162, 1
      %p166 = scmp.eq.s32.totalorder %s18, 3
      %p167 = scmp.ne.s32.totalorder %s162, %s164
      %p168 = scmp.eq.s32.totalorder %s18, 0
      %p169 = por %p167, %p168
      %p170 = scmp.ne.s32.totalorder %s162, %s164
      %p171 = scmp.eq.s32.totalorder %s23, 3
      %p172 = por %p170, %p171
      %p173 = scmp.ne.s32.totalorder %s164, %s165
      %p174 = scmp.eq.s32.totalorder %s23, 0
      %p175 = por %p173, %p174
      %p176 = scmp.ne.s32.totalorder %s164, %s165
      %p177 = scmp.eq.s32.totalorder %s24, 3
      %p178 = por %p176, %p177
      %p180 = scmp.ne.s32.totalorder %s165, %s179
      %p181 = scmp.eq.s32.totalorder %s24, 0
      %p182 = por %p180, %p181
      %s184 = sadd.s32 %s183, 1
      %p187 = scmp.eq.s32.totalorder %s18, 3
      %p188 = scmp.ne.s32.totalorder %s183, %s185
      %p189 = scmp.eq.s32.totalorder %s18, 0
      %p190 = por %p188, %p189
      %p191 = scmp.ne.s32.totalorder %s183, %s185
      %p192 = scmp.eq.s32.totalorder %s23, 3
      %p193 = por %p191, %p192
      %p194 = scmp.ne.s32.totalorder %s185, %s186
      %p195 = scmp.eq.s32.totalorder %s23, 0
      %p196 = por %p194, %p195
      %p197 = scmp.ne.s32.totalorder %s185, %s186
      %p198 = scmp.eq.s32.totalorder %s24, 3
      %p199 = por %p197, %p198
      %p201 = scmp.ne.s32.totalorder %s186, %s200
      %p202 = scmp.eq.s32.totalorder %s24, 0
      %p203 = por %p201, %p202
      %s205 = sadd.s32 %s204, 1
      %p208 = scmp.eq.s32.totalorder %s18, 3
      %p209 = scmp.ne.s32.totalorder %s204, %s206
      %p210 = scmp.eq.s32.totalorder %s18, 0
      %p211 = por %p209, %p210
      %p212 = scmp.ne.s32.totalorder %s204, %s206
      %p213 = scmp.eq.s32.totalorder %s23, 3
      %p214 = por %p212, %p213
      %p215 = scmp.ne.s32.totalorder %s206, %s207
      %p216 = scmp.eq.s32.totalorder %s23, 0
      %p217 = por %p215, %p216
      %p218 = scmp.ne.s32.totalorder %s206, %s207
      %p219 = scmp.eq.s32.totalorder %s24, 3
      %p220 = por %p218, %p219
      %p222 = scmp.ne.s32.totalorder %s207, %s221
      %p223 = scmp.eq.s32.totalorder %s24, 0
      %p224 = por %p222, %p223
      %s225 = ssub.s32 %s18, %s25
      %p226 = scmp.eq.s32.totalorder %s225, 0
      %s228 = sadd.s32 %s227, 1
      %s229 = scalar_select %p226, %s227, %s228
      %p232 = pneg %p226
      %p233 = scmp.eq.s32.totalorder %s18, 3
      %p234 = por %p232, %p233
      %p235 = scmp.ne.s32.totalorder %s227, %s230
      %p236 = scmp.eq.s32.totalorder %s18, 0
      %p237 = por %p235, %p236
      %p238 = scmp.ne.s32.totalorder %s227, %s230
      %p239 = scmp.eq.s32.totalorder %s23, 3
      %p240 = por %p238, %p239
      %p241 = scmp.ne.s32.totalorder %s230, %s231
      %p242 = scmp.eq.s32.totalorder %s23, 0
      %p243 = por %p241, %p242
      %p244 = scmp.ne.s32.totalorder %s230, %s231
      %p245 = scmp.eq.s32.totalorder %s24, 3
      %p246 = por %p244, %p245
      %p248 = scmp.ne.s32.totalorder %s231, %s247
      %p249 = scmp.eq.s32.totalorder %s24, 0
      %p250 = por %p248, %p249
      %p251 = scmp.le.s32.totalorder 1, %s18
      %p252 = scmp.lt.s32.totalorder %s18, 5
      %p253 = pnand %p251, %p252
      %p254 = pneg %p253
      // Predicated region
      $region9: #{renderingnet_pallas.1} parent=5 // pred_check
        _
      $region10: #{renderingnet_pallas.1} parent=5 // pred_check_branch
        %256 = sbr.rel (%p253) target = $region12
      $region11: #{renderingnet_pallas.1} parent=5 // pred_region
        %s257 = ssub.s32 %s18, 1
        // Predicated region
        $region13: #{renderingnet_pallas.1} parent=11 // pred_check
          %p258 = pneg %p91
        $region14: #{renderingnet_pallas.1} parent=11 // pred_check_branch
          %260 = sbr.rel (%p258) target = $region16
        $region15: #{renderingnet_pallas.1} parent=11 // pred_region
          _
        $region16: #{renderingnet_pallas.1} parent=11 // pred_fallthru
          _
        // Predicated region
        $region17: #{renderingnet_pallas.1} parent=11 // pred_check
          %p261 = pneg %p112
        $region18: #{renderingnet_pallas.1} parent=11 // pred_check_branch
          %263 = sbr.rel (%p261) target = $region20
        $region19: #{renderingnet_pallas.1} parent=11 // pred_region
          _
        $region20: #{renderingnet_pallas.1} parent=11 // pred_fallthru
          _
        // Predicated region
        $region21: #{renderingnet_pallas.1} parent=11 // pred_check
          %p264 = pneg %p133
        $region22: #{renderingnet_pallas.1} parent=11 // pred_check_branch
          %266 = sbr.rel (%p264) target = $region24
        $region23: #{renderingnet_pallas.1} parent=11 // pred_region
          _
        $region24: #{renderingnet_pallas.1} parent=11 // pred_fallthru
          _
        // Predicated region
        $region25: #{renderingnet_pallas.1} parent=11 // pred_check
          %p267 = pneg %p154
        $region26: #{renderingnet_pallas.1} parent=11 // pred_check_branch
          %269 = sbr.rel (%p267) target = $region28
        $region27: #{renderingnet_pallas.1} parent=11 // pred_region
          _
        $region28: #{renderingnet_pallas.1} parent=11 // pred_fallthru
          _
        // Predicated region
        $region29: #{renderingnet_pallas.1} parent=11 // pred_check
          %p270 = pneg %p175
        $region30: #{renderingnet_pallas.1} parent=11 // pred_check_branch
          %272 = sbr.rel (%p270) target = $region32
        $region31: #{renderingnet_pallas.1} parent=11 // pred_region
          _
        $region32: #{renderingnet_pallas.1} parent=11 // pred_fallthru
          _
        // Predicated region
        $region33: #{renderingnet_pallas.1} parent=11 // pred_check
          %p273 = pneg %p196
        $region34: #{renderingnet_pallas.1} parent=11 // pred_check_branch
          %275 = sbr.rel (%p273) target = $region36
        $region35: #{renderingnet_pallas.1} parent=11 // pred_region
          _
        $region36: #{renderingnet_pallas.1} parent=11 // pred_fallthru
          _
        // Predicated region
        $region37: #{renderingnet_pallas.1} parent=11 // pred_check
          %p276 = pneg %p217
        $region38: #{renderingnet_pallas.1} parent=11 // pred_check_branch
          %278 = sbr.rel (%p276) target = $region40
        $region39: #{renderingnet_pallas.1} parent=11 // pred_region
          _
        $region40: #{renderingnet_pallas.1} parent=11 // pred_fallthru
          _
      $region12: #{renderingnet_pallas.1} parent=5 // pred_fallthru
        _
      %p279 = scmp.lt.s32.totalorder %s18, 4
      // Predicated region
      $region41: #{renderingnet_pallas.1} parent=5 // pred_check
        %p280 = pneg %p279
      $region42: #{renderingnet_pallas.1} parent=5 // pred_check_branch
        %282 = sbr.rel (%p280) target = $region44
      $region43: #{renderingnet_pallas.1} parent=5 // pred_region
        // Predicated region
        $region45: #{renderingnet_pallas.1} parent=43 // pred_check
          %p283 = pneg %p38
        $region46: #{renderingnet_pallas.1} parent=43 // pred_check_branch
          %285 = sbr.rel (%p283) target = $region48
        $region47: #{renderingnet_pallas.1} parent=43 // pred_region
          %s286 = smul.u32 32, %s18
          %p287 = scmp.lt.s32.totalorder %s286, 127
          %s288 = scalar_select %p287, %s286, 127
          %s289 = smul.addr %s288, 8
          %s290 = scalar_lea.vmem %s0, %s289
          %s291 = smul.u32 32, %s18
        $region48: #{renderingnet_pallas.1} parent=43 // pred_fallthru
          _
        // Predicated region
        $region49: #{renderingnet_pallas.1} parent=43 // pred_check
          %p292 = pneg %p64
        $region50: #{renderingnet_pallas.1} parent=43 // pred_check_branch
          %294 = sbr.rel (%p292) target = $region52
        $region51: #{renderingnet_pallas.1} parent=43 // pred_region
          %s295 = sand.u32 %s54, 1
          %s296 = scalar_lea.sflag [#allocation3], %s295
          %s297 = sand.u32 %s54, 1
          %s298 = smul.addr %s297, 512
          %s299 = scalar_lea.vmem [#allocation2], %s298
          %s300 = smul.u32 32, %s18
          %302 = vsyncadd %s296, 0
          %s303 = smul.addr %s300, 2
          %s304 = smul.addr %s303, 8
          %s305 = scalar_lea.hbm %s1, %s304
          %s306 = sshll.u32 %s305, 4
          %s307 = int_to_ptr.hbm [resolvable:$true] %s306
          %s308 = sshll.u32 %s299, 4
          %s309 = int_to_ptr.vmem [resolvable:$true] %s308
          %314 = dma.hbm_to_vmem [thread:$0]  %s307, 8192, %s309, %s296, 256, 256, 16
        $region52: #{renderingnet_pallas.1} parent=43 // pred_fallthru
          _
      $region44: #{renderingnet_pallas.1} parent=5 // pred_fallthru
        _
      %p315 = scmp.le.s32.totalorder 1, %s18
      %p316 = scmp.lt.s32.totalorder %s18, 5
      %p317 = pnand %p315, %p316
      %p318 = pneg %p317
      // Predicated region
      $region53: #{renderingnet_pallas.1} parent=5 // pred_check
        _
      $region54: #{renderingnet_pallas.1} parent=5 // pred_check_branch
        %320 = sbr.rel (%p317) target = $region56
      $region55: #{renderingnet_pallas.1} parent=5 // pred_region
        %s321 = ssub.s32 %s18, 1
        %s322 = sand.u32 %s57, 1
        %s323 = scalar_lea.sflag [#allocation3], %s322
        %s324 = sand.u32 %s57, 1
        %s325 = smul.addr %s324, 512
        %s326 = scalar_lea.vmem [#allocation2], %s325
        // Predicated region
        $region57: #{renderingnet_pallas.1} parent=55 // pred_check
          %p327 = pneg %p70
        $region58: #{renderingnet_pallas.1} parent=55 // pred_check_branch
          %329 = sbr.rel (%p327) target = $region60
        $region59: #{renderingnet_pallas.1} parent=55 // pred_region
          %331 = dma.done %s323, 8192
        $region60: #{renderingnet_pallas.1} parent=55 // pred_fallthru
          _
        %s332 = smul.u32 32, %s23
        %p333 = scmp.lt.s32.totalorder %s332, 127
        %s334 = scalar_select %p333, %s332, 127
        %s335 = smul.addr %s334, 8
        %s336 = scalar_lea.vmem %s0, %s335
        %p337 = pneg %p44
        %p338 = pneg %p41
        %s339 = sand.u32 %s57, 1
        %s340 = scalar_lea.sflag [#allocation3], %s339
        %s341 = sand.u32 %s57, 1
        %s342 = smul.addr %s341, 512
        %s343 = scalar_lea.vmem [#allocation2], %s342
        %p344 = pneg %p70
        %p345 = pneg %p67
        %p346 = pneg %p91
        %p347 = pneg %p88
        %p348 = pneg %p112
        %p349 = pneg %p109
        %p350 = pneg %p133
        %p351 = pneg %p130
        %p352 = pneg %p154
        %p353 = pneg %p151
        %p354 = pneg %p175
        %p355 = pneg %p172
        %p356 = pneg %p196
        %p357 = pneg %p193
        %p358 = pneg %p217
        %p359 = pneg %p214
        %p360 = pneg %p243
        %p361 = pneg %p240
        %s362 = smul.u32 32, %s23
        %p363 = scmp.lt.s32.totalorder %s362, 127
        %s364 = scalar_select %p363, %s362, 127
        %s365 = smul.addr %s364, 4
        %s366 = scalar_lea.vmem %s9, %s365
        %s367 = smul.u32 32, %s23
        %p368 = scmp.lt.s32.totalorder %s367, 127
        %s369 = scalar_select %p368, %s367, 127
        %s370 = smul.addr %s369, 8
        %s371 = scalar_lea.vmem %s0, %s370
        %s372 = smul.u32 32, %s23
        %s373 = smul.u32 32, %s23
        %s374 = smul.u32 32, %s23
        %p375 = scmp.lt.s32.totalorder %s374, 127
        %s376 = scalar_select %p375, %s374, 127
        %s377 = smul.addr %s376, 4
        %s378 = scalar_lea.vmem %s9, %s377
        %s379 = smul.u32 32, %s23
        %v381 = vld [vmem:[%s326] sm:$0xff]
        %v382 = vld [vmem:[%s326 + $0x8] sm:$0xff]
        %v383 = vld [vmem:[%s326 + $0x10] sm:$0xff]
        %v384 = vld [vmem:[%s326 + $0x18] sm:$0xff]
        %v385 = vld [vmem:[%s326 + $0x20] sm:$0xff]
        %v386 = vld [vmem:[%s326 + $0x28] sm:$0xff]
        %v387 = vld [vmem:[%s326 + $0x30] sm:$0xff]
        %v388 = vld [vmem:[%s326 + $0x38] sm:$0xff]
        %v389 = vld [vmem:[%s326 + $0x40] sm:$0xff]
        %v390 = vld [vmem:[%s326 + $0x48] sm:$0xff]
        %v391 = vld [vmem:[%s326 + $0x50] sm:$0xff]
        %v392 = vld [vmem:[%s326 + $0x58] sm:$0xff]
        %v393 = vld [vmem:[%s326 + $0x60] sm:$0xff]
        %v394 = vld [vmem:[%s326 + $0x68] sm:$0xff]
        %v395 = vld [vmem:[%s326 + $0x70] sm:$0xff]
        %v396 = vld [vmem:[%s326 + $0x78] sm:$0xff]
        %v397 = vld [vmem:[%s326 + $0x80] sm:$0xff]
        %v398 = vld [vmem:[%s326 + $0x88] sm:$0xff]
        %v399 = vld [vmem:[%s326 + $0x90] sm:$0xff]
        %v400 = vld [vmem:[%s326 + $0x98] sm:$0xff]
        %v401 = vld [vmem:[%s326 + $0xa0] sm:$0xff]
        %v402 = vld [vmem:[%s326 + $0xa8] sm:$0xff]
        %v403 = vld [vmem:[%s326 + $0xb0] sm:$0xff]
        %v404 = vld [vmem:[%s326 + $0xb8] sm:$0xff]
        %v405 = vld [vmem:[%s326 + $0xc0] sm:$0xff]
        %v406 = vld [vmem:[%s326 + $0xc8] sm:$0xff]
        %v407 = vld [vmem:[%s326 + $0xd0] sm:$0xff]
        %v408 = vld [vmem:[%s326 + $0xd8] sm:$0xff]
        %v409 = vld [vmem:[%s326 + $0xe0] sm:$0xff]
        %v410 = vld [vmem:[%s326 + $0xe8] sm:$0xff]
        %v411 = vld [vmem:[%s326 + $0xf0] sm:$0xff]
        %v412 = vld [vmem:[%s326 + $0xf8] sm:$0xff]
        %v413 = vld [vmem:[%s326 + $0x100] sm:$0xff]
        %v414 = vld [vmem:[%s326 + $0x108] sm:$0xff]
        %v415 = vld [vmem:[%s326 + $0x110] sm:$0xff]
        %v416 = vld [vmem:[%s326 + $0x118] sm:$0xff]
        %v417 = vld [vmem:[%s326 + $0x120] sm:$0xff]
        %v418 = vld [vmem:[%s326 + $0x128] sm:$0xff]
        %v419 = vld [vmem:[%s326 + $0x130] sm:$0xff]
        %v420 = vld [vmem:[%s326 + $0x138] sm:$0xff]
        %v421 = vld [vmem:[%s326 + $0x140] sm:$0xff]
        %v422 = vld [vmem:[%s326 + $0x148] sm:$0xff]
        %v423 = vld [vmem:[%s326 + $0x150] sm:$0xff]
        %v424 = vld [vmem:[%s326 + $0x158] sm:$0xff]
        %v425 = vld [vmem:[%s326 + $0x160] sm:$0xff]
        %v426 = vld [vmem:[%s326 + $0x168] sm:$0xff]
        %v427 = vld [vmem:[%s326 + $0x170] sm:$0xff]
        %v428 = vld [vmem:[%s326 + $0x178] sm:$0xff]
        %v429 = vld [vmem:[%s326 + $0x180] sm:$0xff]
        %v430 = vld [vmem:[%s326 + $0x188] sm:$0xff]
        %v431 = vld [vmem:[%s326 + $0x190] sm:$0xff]
        %v432 = vld [vmem:[%s326 + $0x198] sm:$0xff]
        %v433 = vld [vmem:[%s326 + $0x1a0] sm:$0xff]
        %v434 = vld [vmem:[%s326 + $0x1a8] sm:$0xff]
        %v435 = vld [vmem:[%s326 + $0x1b0] sm:$0xff]
        %v436 = vld [vmem:[%s326 + $0x1b8] sm:$0xff]
        %v437 = vld [vmem:[%s326 + $0x1c0] sm:$0xff]
        %v438 = vld [vmem:[%s326 + $0x1c8] sm:$0xff]
        %v439 = vld [vmem:[%s326 + $0x1d0] sm:$0xff]
        %v440 = vld [vmem:[%s326 + $0x1d8] sm:$0xff]
        %v441 = vld [vmem:[%s326 + $0x1e0] sm:$0xff]
        %v442 = vld [vmem:[%s326 + $0x1e8] sm:$0xff]
        %v443 = vld [vmem:[%s326 + $0x1f0] sm:$0xff]
        %v444 = vld [vmem:[%s326 + $0x1f8] sm:$0xff]
        %v445 = vpack.c.bf16 %v383, %v381
        %v446 = vpack.c.bf16 %v384, %v382
        %v447 = vpack.c.bf16 %v387, %v385
        %v448 = vpack.c.bf16 %v388, %v386
        %v449 = vpack.c.bf16 %v391, %v389
        %v450 = vpack.c.bf16 %v392, %v390
        %v451 = vpack.c.bf16 %v395, %v393
        %v452 = vpack.c.bf16 %v396, %v394
        %v453 = vpack.c.bf16 %v399, %v397
        %v454 = vpack.c.bf16 %v400, %v398
        %v455 = vpack.c.bf16 %v403, %v401
        %v456 = vpack.c.bf16 %v404, %v402
        %v457 = vpack.c.bf16 %v407, %v405
        %v458 = vpack.c.bf16 %v408, %v406
        %v459 = vpack.c.bf16 %v411, %v409
        %v460 = vpack.c.bf16 %v412, %v410
        %v461 = vpack.c.bf16 %v415, %v413
        %v462 = vpack.c.bf16 %v416, %v414
        %v463 = vpack.c.bf16 %v419, %v417
        %v464 = vpack.c.bf16 %v420, %v418
        %v465 = vpack.c.bf16 %v423, %v421
        %v466 = vpack.c.bf16 %v424, %v422
        %v467 = vpack.c.bf16 %v427, %v425
        %v468 = vpack.c.bf16 %v428, %v426
        %v469 = vpack.c.bf16 %v431, %v429
        %v470 = vpack.c.bf16 %v432, %v430
        %v471 = vpack.c.bf16 %v435, %v433
        %v472 = vpack.c.bf16 %v436, %v434
        %v473 = vpack.c.bf16 %v439, %v437
        %v474 = vpack.c.bf16 %v440, %v438
        %v475 = vpack.c.bf16 %v443, %v441
        %v476 = vpack.c.bf16 %v444, %v442
        %v477 = vld [vmem:[%s3] sm:$0xff]
        %v478 = vld [vmem:[%s3 + $0x8] sm:$0xff]
        %v479 = vld [vmem:[%s3 + $0x10] sm:$0xff]
        %v480 = vld [vmem:[%s3 + $0x18] sm:$0xff]
        %v481 = vld [vmem:[%s3 + $0x20] sm:$0xff]
        %v482 = vld [vmem:[%s3 + $0x28] sm:$0xff]
        %v483 = vld [vmem:[%s3 + $0x30] sm:$0xff]
        %v484 = vld [vmem:[%s3 + $0x38] sm:$0xff]
        %v485 = vld [vmem:[%s3 + $0x40] sm:$0xff]
        %v486 = vld [vmem:[%s3 + $0x48] sm:$0xff]
        %v487 = vld [vmem:[%s3 + $0x50] sm:$0xff]
        %v488 = vld [vmem:[%s3 + $0x58] sm:$0xff]
        %v489 = vld [vmem:[%s3 + $0x60] sm:$0xff]
        %v490 = vld [vmem:[%s3 + $0x68] sm:$0xff]
        %v491 = vld [vmem:[%s3 + $0x70] sm:$0xff]
        %v492 = vld [vmem:[%s3 + $0x78] sm:$0xff]
        %v493 = vld [vmem:[%s3 + $0x80] sm:$0xff]
        %v494 = vld [vmem:[%s3 + $0x88] sm:$0xff]
        %v495 = vld [vmem:[%s3 + $0x90] sm:$0xff]
        %v496 = vld [vmem:[%s3 + $0x98] sm:$0xff]
        %v497 = vld [vmem:[%s3 + $0xa0] sm:$0xff]
        %v498 = vld [vmem:[%s3 + $0xa8] sm:$0xff]
        %v499 = vld [vmem:[%s3 + $0xb0] sm:$0xff]
        %v500 = vld [vmem:[%s3 + $0xb8] sm:$0xff]
        %v501 = vld [vmem:[%s3 + $0xc0] sm:$0xff]
        %v502 = vld [vmem:[%s3 + $0xc8] sm:$0xff]
        %v503 = vld [vmem:[%s3 + $0xd0] sm:$0xff]
        %v504 = vld [vmem:[%s3 + $0xd8] sm:$0xff]
        %v505 = vld [vmem:[%s3 + $0xe0] sm:$0xff]
        %v506 = vld [vmem:[%s3 + $0xe8] sm:$0xff]
        %v507 = vld [vmem:[%s3 + $0xf0] sm:$0xff]
        %v508 = vld [vmem:[%s3 + $0xf8] sm:$0xff]
        %v509 = vld [vmem:[%s371] sm:$0xff]
        %v510 = vld [vmem:[%s371 + $0x8] sm:$0xff]
        %v511 = vld [vmem:[%s371 + $0x10] sm:$0xff]
        %v512 = vld [vmem:[%s371 + $0x18] sm:$0xff]
        %v513 = vld [vmem:[%s371 + $0x20] sm:$0xff]
        %v514 = vld [vmem:[%s371 + $0x28] sm:$0xff]
        %v515 = vld [vmem:[%s371 + $0x30] sm:$0xff]
        %v516 = vld [vmem:[%s371 + $0x38] sm:$0xff]
        %v517 = vld [vmem:[%s371 + $0x40] sm:$0xff]
        %v518 = vld [vmem:[%s371 + $0x48] sm:$0xff]
        %v519 = vld [vmem:[%s371 + $0x50] sm:$0xff]
        %v520 = vld [vmem:[%s371 + $0x58] sm:$0xff]
        %v521 = vld [vmem:[%s371 + $0x60] sm:$0xff]
        %v522 = vld [vmem:[%s371 + $0x68] sm:$0xff]
        %v523 = vld [vmem:[%s371 + $0x70] sm:$0xff]
        %v524 = vld [vmem:[%s371 + $0x78] sm:$0xff]
        %v525 = vld [vmem:[%s371 + $0x80] sm:$0xff]
        %v526 = vld [vmem:[%s371 + $0x88] sm:$0xff]
        %v527 = vld [vmem:[%s371 + $0x90] sm:$0xff]
        %v528 = vld [vmem:[%s371 + $0x98] sm:$0xff]
        %v529 = vld [vmem:[%s371 + $0xa0] sm:$0xff]
        %v530 = vld [vmem:[%s371 + $0xa8] sm:$0xff]
        %v531 = vld [vmem:[%s371 + $0xb0] sm:$0xff]
        %v532 = vld [vmem:[%s371 + $0xb8] sm:$0xff]
        %v533 = vld [vmem:[%s371 + $0xc0] sm:$0xff]
        %v534 = vld [vmem:[%s371 + $0xc8] sm:$0xff]
        %v535 = vld [vmem:[%s371 + $0xd0] sm:$0xff]
        %v536 = vld [vmem:[%s371 + $0xd8] sm:$0xff]
        %v537 = vld [vmem:[%s371 + $0xe0] sm:$0xff]
        %v538 = vld [vmem:[%s371 + $0xe8] sm:$0xff]
        %v539 = vld [vmem:[%s371 + $0xf0] sm:$0xff]
        %v540 = vld [vmem:[%s371 + $0xf8] sm:$0xff]
        %v541 = vpack.c.bf16 %v510, %v509
        %v542 = vpack.c.bf16 %v512, %v511
        %v543 = vpack.c.bf16 %v514, %v513
        %v544 = vpack.c.bf16 %v516, %v515
        %v545 = vpack.c.bf16 %v518, %v517
        %v546 = vpack.c.bf16 %v520, %v519
        %v547 = vpack.c.bf16 %v522, %v521
        %v548 = vpack.c.bf16 %v524, %v523
        %v549 = vpack.c.bf16 %v526, %v525
        %v550 = vpack.c.bf16 %v528, %v527
        %v551 = vpack.c.bf16 %v530, %v529
        %v552 = vpack.c.bf16 %v532, %v531
        %v553 = vpack.c.bf16 %v534, %v533
        %v554 = vpack.c.bf16 %v536, %v535
        %v555 = vpack.c.bf16 %v538, %v537
        %v556 = vpack.c.bf16 %v540, %v539
        %v557 = vld [vmem:[%s2] sm:$0x77]
        %v559 = vunpack.c.l.b16 %v557
        %v560 = vunpack.c.h.b16 %v557
        %v561 = vpack.c.b16 %v559, %v559
        %v562 = vpack.c.b16 %v560, %v560
        %vm563 = vcmask 48128
        %v565 = vsel %vm563, %v541, 0
        %v568 = vsel %vm563, %v542, 0
        %v571 = vsel %vm563, %v543, 0
        %v574 = vsel %vm563, %v544, 0
        %v577 = vsel %vm563, %v545, 0
        %v580 = vsel %vm563, %v546, 0
        %v583 = vsel %vm563, %v547, 0
        %v586 = vsel %vm563, %v548, 0
        %v589 = vsel %vm563, %v549, 0
        %v592 = vsel %vm563, %v550, 0
        %v595 = vsel %vm563, %v551, 0
        %v598 = vsel %vm563, %v552, 0
        %v601 = vsel %vm563, %v553, 0
        %v604 = vsel %vm563, %v554, 0
        %v607 = vsel %vm563, %v555, 0
        %v610 = vsel %vm563, %v556, 0
        %vm612 = vcmask 1042432
        %v614 = vsel %vm612, %v561, 0
        %v617 = vsel %vm612, %v562, 0
        %619 = vmatpush.bf16.msra.mxu0 0
        %620 = vmatpush.bf16.msra.mxu0 0
        %621 = vmatpush.bf16.msra.mxu0 0
        %622 = vmatpush.bf16.msra.mxu0 0
        %623 = vmatpush.bf16.msra.mxu0 0
        %624 = vmatpush.bf16.msra.mxu0 0
        %625 = vmatpush.bf16.msra.mxu0 0
        %626 = vmatpush.bf16.msra.mxu0 %v614
        %627 = vmatmul.bf16.gmra.mxu0 %v565
        %v628 = vpop.f32.mrf.mxu0
        %v629 = vadd.f32 0.0, %v628
        %v630 = vpop.f32.mrf.mxu0
        %v631 = vadd.f32 0.0, %v630
        %632 = vmatmul.bf16.gmra.mxu0 %v568
        %v633 = vpop.f32.mrf.mxu0
        %v634 = vadd.f32 0.0, %v633
        %v635 = vpop.f32.mrf.mxu0
        %v636 = vadd.f32 0.0, %v635
        %637 = vmatmul.bf16.gmra.mxu0 %v571
        %v638 = vpop.f32.mrf.mxu0
        %v639 = vadd.f32 0.0, %v638
        %v640 = vpop.f32.mrf.mxu0
        %v641 = vadd.f32 0.0, %v640
        %642 = vmatmul.bf16.gmra.mxu0 %v574
        %v643 = vpop.f32.mrf.mxu0
        %v644 = vadd.f32 0.0, %v643
        %v645 = vpop.f32.mrf.mxu0
        %v646 = vadd.f32 0.0, %v645
        %647 = vmatmul.bf16.gmra.mxu0 %v577
        %v648 = vpop.f32.mrf.mxu0
        %v649 = vadd.f32 0.0, %v648
        %v650 = vpop.f32.mrf.mxu0
        %v651 = vadd.f32 0.0, %v650
        %652 = vmatmul.bf16.gmra.mxu0 %v580
        %v653 = vpop.f32.mrf.mxu0
        %v654 = vadd.f32 0.0, %v653
        %v655 = vpop.f32.mrf.mxu0
        %v656 = vadd.f32 0.0, %v655
        %657 = vmatmul.bf16.gmra.mxu0 %v583
        %v658 = vpop.f32.mrf.mxu0
        %v659 = vadd.f32 0.0, %v658
        %v660 = vpop.f32.mrf.mxu0
        %v661 = vadd.f32 0.0, %v660
        %662 = vmatmul.bf16.gmra.mxu0 %v586
        %v663 = vpop.f32.mrf.mxu0
        %v664 = vadd.f32 0.0, %v663
        %v665 = vpop.f32.mrf.mxu0
        %v666 = vadd.f32 0.0, %v665
        %667 = vmatmul.bf16.gmra.mxu0 %v589
        %v668 = vpop.f32.mrf.mxu0
        %v669 = vadd.f32 0.0, %v668
        %v670 = vpop.f32.mrf.mxu0
        %v671 = vadd.f32 0.0, %v670
        %672 = vmatmul.bf16.gmra.mxu0 %v592
        %v673 = vpop.f32.mrf.mxu0
        %v674 = vadd.f32 0.0, %v673
        %v675 = vpop.f32.mrf.mxu0
        %v676 = vadd.f32 0.0, %v675
        %677 = vmatmul.bf16.gmra.mxu0 %v595
        %v678 = vpop.f32.mrf.mxu0
        %v679 = vadd.f32 0.0, %v678
        %v680 = vpop.f32.mrf.mxu0
        %v681 = vadd.f32 0.0, %v680
        %682 = vmatmul.bf16.gmra.mxu0 %v598
        %v683 = vpop.f32.mrf.mxu0
        %v684 = vadd.f32 0.0, %v683
        %v685 = vpop.f32.mrf.mxu0
        %v686 = vadd.f32 0.0, %v685
        %687 = vmatmul.bf16.gmra.mxu0 %v601
        %v688 = vpop.f32.mrf.mxu0
        %v689 = vadd.f32 0.0, %v688
        %v690 = vpop.f32.mrf.mxu0
        %v691 = vadd.f32 0.0, %v690
        %692 = vmatmul.bf16.gmra.mxu0 %v604
        %v693 = vpop.f32.mrf.mxu0
        %v694 = vadd.f32 0.0, %v693
        %v695 = vpop.f32.mrf.mxu0
        %v696 = vadd.f32 0.0, %v695
        %697 = vmatmul.bf16.gmra.mxu0 %v607
        %v698 = vpop.f32.mrf.mxu0
        %v699 = vadd.f32 0.0, %v698
        %v700 = vpop.f32.mrf.mxu0
        %v701 = vadd.f32 0.0, %v700
        %702 = vmatmul.bf16.gmra.mxu0 %v610
        %v703 = vpop.f32.mrf.mxu0
        %v704 = vadd.f32 0.0, %v703
        %v705 = vpop.f32.mrf.mxu0
        %v706 = vadd.f32 0.0, %v705
        %707 = vdwg.mxu0
        %708 = vmatpush.bf16.msra.mxu0 0
        %709 = vmatpush.bf16.msra.mxu0 0
        %710 = vmatpush.bf16.msra.mxu0 0
        %711 = vmatpush.bf16.msra.mxu0 0
        %712 = vmatpush.bf16.msra.mxu0 0
        %713 = vmatpush.bf16.msra.mxu0 0
        %714 = vmatpush.bf16.msra.mxu0 0
        %715 = vmatpush.bf16.msra.mxu0 %v617
        %716 = vmatmul.bf16.gmra.mxu0 %v565
        %v717 = vpop.f32.mrf.mxu0
        %v718 = vadd.f32 0.0, %v717
        %v719 = vpop.f32.mrf.mxu0
        %v720 = vadd.f32 0.0, %v719
        %721 = vmatmul.bf16.gmra.mxu0 %v568
        %v722 = vpop.f32.mrf.mxu0
        %v723 = vadd.f32 0.0, %v722
        %v724 = vpop.f32.mrf.mxu0
        %v725 = vadd.f32 0.0, %v724
        %726 = vmatmul.bf16.gmra.mxu0 %v571
        %v727 = vpop.f32.mrf.mxu0
        %v728 = vadd.f32 0.0, %v727
        %v729 = vpop.f32.mrf.mxu0
        %v730 = vadd.f32 0.0, %v729
        %731 = vmatmul.bf16.gmra.mxu0 %v574
        %v732 = vpop.f32.mrf.mxu0
        %v733 = vadd.f32 0.0, %v732
        %v734 = vpop.f32.mrf.mxu0
        %v735 = vadd.f32 0.0, %v734
        %736 = vmatmul.bf16.gmra.mxu0 %v577
        %v737 = vpop.f32.mrf.mxu0
        %v738 = vadd.f32 0.0, %v737
        %v739 = vpop.f32.mrf.mxu0
        %v740 = vadd.f32 0.0, %v739
        %741 = vmatmul.bf16.gmra.mxu0 %v580
        %v742 = vpop.f32.mrf.mxu0
        %v743 = vadd.f32 0.0, %v742
        %v744 = vpop.f32.mrf.mxu0
        %v745 = vadd.f32 0.0, %v744
        %746 = vmatmul.bf16.gmra.mxu0 %v583
        %v747 = vpop.f32.mrf.mxu0
        %v748 = vadd.f32 0.0, %v747
        %v749 = vpop.f32.mrf.mxu0
        %v750 = vadd.f32 0.0, %v749
        %751 = vmatmul.bf16.gmra.mxu0 %v586
        %v752 = vpop.f32.mrf.mxu0
        %v753 = vadd.f32 0.0, %v752
        %v754 = vpop.f32.mrf.mxu0
        %v755 = vadd.f32 0.0, %v754
        %756 = vmatmul.bf16.gmra.mxu0 %v589
        %v757 = vpop.f32.mrf.mxu0
        %v758 = vadd.f32 0.0, %v757
        %v759 = vpop.f32.mrf.mxu0
        %v760 = vadd.f32 0.0, %v759
        %761 = vmatmul.bf16.gmra.mxu0 %v592
        %v762 = vpop.f32.mrf.mxu0
        %v763 = vadd.f32 0.0, %v762
        %v764 = vpop.f32.mrf.mxu0
        %v765 = vadd.f32 0.0, %v764
        %766 = vmatmul.bf16.gmra.mxu0 %v595
        %v767 = vpop.f32.mrf.mxu0
        %v768 = vadd.f32 0.0, %v767
        %v769 = vpop.f32.mrf.mxu0
        %v770 = vadd.f32 0.0, %v769
        %771 = vmatmul.bf16.gmra.mxu0 %v598
        %v772 = vpop.f32.mrf.mxu0
        %v773 = vadd.f32 0.0, %v772
        %v774 = vpop.f32.mrf.mxu0
        %v775 = vadd.f32 0.0, %v774
        %776 = vmatmul.bf16.gmra.mxu0 %v601
        %v777 = vpop.f32.mrf.mxu0
        %v778 = vadd.f32 0.0, %v777
        %v779 = vpop.f32.mrf.mxu0
        %v780 = vadd.f32 0.0, %v779
        %781 = vmatmul.bf16.gmra.mxu0 %v604
        %v782 = vpop.f32.mrf.mxu0
        %v783 = vadd.f32 0.0, %v782
        %v784 = vpop.f32.mrf.mxu0
        %v785 = vadd.f32 0.0, %v784
        %786 = vmatmul.bf16.gmra.mxu0 %v607
        %v787 = vpop.f32.mrf.mxu0
        %v788 = vadd.f32 0.0, %v787
        %v789 = vpop.f32.mrf.mxu0
        %v790 = vadd.f32 0.0, %v789
        %791 = vmatmul.bf16.gmra.mxu0 %v610
        %v792 = vpop.f32.mrf.mxu0
        %v793 = vadd.f32 0.0, %v792
        %v794 = vpop.f32.mrf.mxu0
        %v795 = vadd.f32 0.0, %v794
        %796 = vdwg.mxu0
        %v829 = vunpack.c.l.b16 %v477
        %v830 = vunpack.c.h.b16 %v477
        %v831 = vunpack.c.l.b16 %v478
        %v832 = vunpack.c.h.b16 %v478
        %v833 = vunpack.c.l.b16 %v479
        %v834 = vunpack.c.h.b16 %v479
        %v835 = vunpack.c.l.b16 %v480
        %v836 = vunpack.c.h.b16 %v480
        %v837 = vunpack.c.l.b16 %v481
        %v838 = vunpack.c.h.b16 %v481
        %v839 = vunpack.c.l.b16 %v482
        %v840 = vunpack.c.h.b16 %v482
        %v841 = vunpack.c.l.b16 %v483
        %v842 = vunpack.c.h.b16 %v483
        %v843 = vunpack.c.l.b16 %v484
        %v844 = vunpack.c.h.b16 %v484
        %v845 = vunpack.c.l.b16 %v485
        %v846 = vunpack.c.h.b16 %v485
        %v847 = vunpack.c.l.b16 %v486
        %v848 = vunpack.c.h.b16 %v486
        %v849 = vunpack.c.l.b16 %v487
        %v850 = vunpack.c.h.b16 %v487
        %v851 = vunpack.c.l.b16 %v488
        %v852 = vunpack.c.h.b16 %v488
        %v853 = vunpack.c.l.b16 %v489
        %v854 = vunpack.c.h.b16 %v489
        %v855 = vunpack.c.l.b16 %v490
        %v856 = vunpack.c.h.b16 %v490
        %v857 = vunpack.c.l.b16 %v491
        %v858 = vunpack.c.h.b16 %v491
        %v859 = vunpack.c.l.b16 %v492
        %v860 = vunpack.c.h.b16 %v492
        %v861 = vunpack.c.l.b16 %v493
        %v862 = vunpack.c.h.b16 %v493
        %v863 = vunpack.c.l.b16 %v494
        %v864 = vunpack.c.h.b16 %v494
        %v865 = vunpack.c.l.b16 %v495
        %v866 = vunpack.c.h.b16 %v495
        %v867 = vunpack.c.l.b16 %v496
        %v868 = vunpack.c.h.b16 %v496
        %v869 = vunpack.c.l.b16 %v497
        %v870 = vunpack.c.h.b16 %v497
        %v871 = vunpack.c.l.b16 %v498
        %v872 = vunpack.c.h.b16 %v498
        %v873 = vunpack.c.l.b16 %v499
        %v874 = vunpack.c.h.b16 %v499
        %v875 = vunpack.c.l.b16 %v500
        %v876 = vunpack.c.h.b16 %v500
        %v877 = vunpack.c.l.b16 %v501
        %v878 = vunpack.c.h.b16 %v501
        %v879 = vunpack.c.l.b16 %v502
        %v880 = vunpack.c.h.b16 %v502
        %v881 = vunpack.c.l.b16 %v503
        %v882 = vunpack.c.h.b16 %v503
        %v883 = vunpack.c.l.b16 %v504
        %v884 = vunpack.c.h.b16 %v504
        %v885 = vunpack.c.l.b16 %v505
        %v886 = vunpack.c.h.b16 %v505
        %v887 = vunpack.c.l.b16 %v506
        %v888 = vunpack.c.h.b16 %v506
        %v889 = vunpack.c.l.b16 %v507
        %v890 = vunpack.c.h.b16 %v507
        %v891 = vunpack.c.l.b16 %v508
        %v892 = vunpack.c.h.b16 %v508
        %v893 = vpack.c.b16 %v831, %v829
        %v894 = vpack.c.b16 %v832, %v830
        %v895 = vpack.c.b16 %v835, %v833
        %v896 = vpack.c.b16 %v836, %v834
        %v897 = vpack.c.b16 %v839, %v837
        %v898 = vpack.c.b16 %v840, %v838
        %v899 = vpack.c.b16 %v843, %v841
        %v900 = vpack.c.b16 %v844, %v842
        %v901 = vpack.c.b16 %v847, %v845
        %v902 = vpack.c.b16 %v848, %v846
        %v903 = vpack.c.b16 %v851, %v849
        %v904 = vpack.c.b16 %v852, %v850
        %v905 = vpack.c.b16 %v855, %v853
        %v906 = vpack.c.b16 %v856, %v854
        %v907 = vpack.c.b16 %v859, %v857
        %v908 = vpack.c.b16 %v860, %v858
        %v909 = vpack.c.b16 %v863, %v861
        %v910 = vpack.c.b16 %v864, %v862
        %v911 = vpack.c.b16 %v867, %v865
        %v912 = vpack.c.b16 %v868, %v866
        %v913 = vpack.c.b16 %v871, %v869
        %v914 = vpack.c.b16 %v872, %v870
        %v915 = vpack.c.b16 %v875, %v873
        %v916 = vpack.c.b16 %v876, %v874
        %v917 = vpack.c.b16 %v879, %v877
        %v918 = vpack.c.b16 %v880, %v878
        %v919 = vpack.c.b16 %v883, %v881
        %v920 = vpack.c.b16 %v884, %v882
        %v921 = vpack.c.b16 %v887, %v885
        %v922 = vpack.c.b16 %v888, %v886
        %v923 = vpack.c.b16 %v891, %v889
        %v924 = vpack.c.b16 %v892, %v890
        %957 = vmatpush.bf16.msra.mxu0 %v907
        %958 = vmatpush.bf16.msra.mxu0 %v905
        %959 = vmatpush.bf16.msra.mxu0 %v903
        %960 = vmatpush.bf16.msra.mxu0 %v901
        %961 = vmatpush.bf16.msra.mxu0 %v899
        %962 = vmatpush.bf16.msra.mxu0 %v897
        %963 = vmatpush.bf16.msra.mxu0 %v895
        %964 = vmatpush.bf16.msra.mxu0 %v893
        %965 = vmatmul.bf16.gmra.mxu0 %v445
        %v966 = vpop.f32.mrf.mxu0
        %v967 = vadd.f32 %v629, %v966
        %v968 = vpop.f32.mrf.mxu0
        %v969 = vadd.f32 %v631, %v968
        %970 = vmatmul.bf16.gmra.mxu0 %v447
        %v971 = vpop.f32.mrf.mxu0
        %v972 = vadd.f32 %v634, %v971
        %v973 = vpop.f32.mrf.mxu0
        %v974 = vadd.f32 %v636, %v973
        %975 = vmatmul.bf16.gmra.mxu0 %v449
        %v976 = vpop.f32.mrf.mxu0
        %v977 = vadd.f32 %v639, %v976
        %v978 = vpop.f32.mrf.mxu0
        %v979 = vadd.f32 %v641, %v978
        %980 = vmatmul.bf16.gmra.mxu0 %v451
        %v981 = vpop.f32.mrf.mxu0
        %v982 = vadd.f32 %v644, %v981
        %v983 = vpop.f32.mrf.mxu0
        %v984 = vadd.f32 %v646, %v983
        %985 = vmatmul.bf16.gmra.mxu0 %v453
        %v986 = vpop.f32.mrf.mxu0
        %v987 = vadd.f32 %v649, %v986
        %v988 = vpop.f32.mrf.mxu0
        %v989 = vadd.f32 %v651, %v988
        %990 = vmatmul.bf16.gmra.mxu0 %v455
        %v991 = vpop.f32.mrf.mxu0
        %v992 = vadd.f32 %v654, %v991
        %v993 = vpop.f32.mrf.mxu0
        %v994 = vadd.f32 %v656, %v993
        %995 = vmatmul.bf16.gmra.mxu0 %v457
        %v996 = vpop.f32.mrf.mxu0
        %v997 = vadd.f32 %v659, %v996
        %v998 = vpop.f32.mrf.mxu0
        %v999 = vadd.f32 %v661, %v998
        %1000 = vmatmul.bf16.gmra.mxu0 %v459
        %v1001 = vpop.f32.mrf.mxu0
        %v1002 = vadd.f32 %v664, %v1001
        %v1003 = vpop.f32.mrf.mxu0
        %v1004 = vadd.f32 %v666, %v1003
        %1005 = vmatmul.bf16.gmra.mxu0 %v461
        %v1006 = vpop.f32.mrf.mxu0
        %v1007 = vadd.f32 %v669, %v1006
        %v1008 = vpop.f32.mrf.mxu0
        %v1009 = vadd.f32 %v671, %v1008
        %1010 = vmatmul.bf16.gmra.mxu0 %v463
        %v1011 = vpop.f32.mrf.mxu0
        %v1012 = vadd.f32 %v674, %v1011
        %v1013 = vpop.f32.mrf.mxu0
        %v1014 = vadd.f32 %v676, %v1013
        %1015 = vmatmul.bf16.gmra.mxu0 %v465
        %v1016 = vpop.f32.mrf.mxu0
        %v1017 = vadd.f32 %v679, %v1016
        %v1018 = vpop.f32.mrf.mxu0
        %v1019 = vadd.f32 %v681, %v1018
        %1020 = vmatmul.bf16.gmra.mxu0 %v467
        %v1021 = vpop.f32.mrf.mxu0
        %v1022 = vadd.f32 %v684, %v1021
        %v1023 = vpop.f32.mrf.mxu0
        %v1024 = vadd.f32 %v686, %v1023
        %1025 = vmatmul.bf16.gmra.mxu0 %v469
        %v1026 = vpop.f32.mrf.mxu0
        %v1027 = vadd.f32 %v689, %v1026
        %v1028 = vpop.f32.mrf.mxu0
        %v1029 = vadd.f32 %v691, %v1028
        %1030 = vmatmul.bf16.gmra.mxu0 %v471
        %v1031 = vpop.f32.mrf.mxu0
        %v1032 = vadd.f32 %v694, %v1031
        %v1033 = vpop.f32.mrf.mxu0
        %v1034 = vadd.f32 %v696, %v1033
        %1035 = vmatmul.bf16.gmra.mxu0 %v473
        %v1036 = vpop.f32.mrf.mxu0
        %v1037 = vadd.f32 %v699, %v1036
        %v1038 = vpop.f32.mrf.mxu0
        %v1039 = vadd.f32 %v701, %v1038
        %1040 = vmatmul.bf16.gmra.mxu0 %v475
        %v1041 = vpop.f32.mrf.mxu0
        %v1042 = vadd.f32 %v704, %v1041
        %v1043 = vpop.f32.mrf.mxu0
        %v1044 = vadd.f32 %v706, %v1043
        %1045 = vdwg.mxu0
        %1046 = vmatpush.bf16.msra.mxu0 %v923
        %1047 = vmatpush.bf16.msra.mxu0 %v921
        %1048 = vmatpush.bf16.msra.mxu0 %v919
        %1049 = vmatpush.bf16.msra.mxu0 %v917
        %1050 = vmatpush.bf16.msra.mxu0 %v915
        %1051 = vmatpush.bf16.msra.mxu0 %v913
        %1052 = vmatpush.bf16.msra.mxu0 %v911
        %1053 = vmatpush.bf16.msra.mxu0 %v909
        %1054 = vmatmul.bf16.gmra.mxu0 %v446
        %v1055 = vpop.f32.mrf.mxu0
        %v1056 = vadd.f32 %v967, %v1055
        %v1057 = vpop.f32.mrf.mxu0
        %v1058 = vadd.f32 %v969, %v1057
        %1059 = vmatmul.bf16.gmra.mxu0 %v448
        %v1060 = vpop.f32.mrf.mxu0
        %v1061 = vadd.f32 %v972, %v1060
        %v1062 = vpop.f32.mrf.mxu0
        %v1063 = vadd.f32 %v974, %v1062
        %1064 = vmatmul.bf16.gmra.mxu0 %v450
        %v1065 = vpop.f32.mrf.mxu0
        %v1066 = vadd.f32 %v977, %v1065
        %v1067 = vpop.f32.mrf.mxu0
        %v1068 = vadd.f32 %v979, %v1067
        %1069 = vmatmul.bf16.gmra.mxu0 %v452
        %v1070 = vpop.f32.mrf.mxu0
        %v1071 = vadd.f32 %v982, %v1070
        %v1072 = vpop.f32.mrf.mxu0
        %v1073 = vadd.f32 %v984, %v1072
        %1074 = vmatmul.bf16.gmra.mxu0 %v454
        %v1075 = vpop.f32.mrf.mxu0
        %v1076 = vadd.f32 %v987, %v1075
        %v1077 = vpop.f32.mrf.mxu0
        %v1078 = vadd.f32 %v989, %v1077
        %1079 = vmatmul.bf16.gmra.mxu0 %v456
        %v1080 = vpop.f32.mrf.mxu0
        %v1081 = vadd.f32 %v992, %v1080
        %v1082 = vpop.f32.mrf.mxu0
        %v1083 = vadd.f32 %v994, %v1082
        %1084 = vmatmul.bf16.gmra.mxu0 %v458
        %v1085 = vpop.f32.mrf.mxu0
        %v1086 = vadd.f32 %v997, %v1085
        %v1087 = vpop.f32.mrf.mxu0
        %v1088 = vadd.f32 %v999, %v1087
        %1089 = vmatmul.bf16.gmra.mxu0 %v460
        %v1090 = vpop.f32.mrf.mxu0
        %v1091 = vadd.f32 %v1002, %v1090
        %v1092 = vpop.f32.mrf.mxu0
        %v1093 = vadd.f32 %v1004, %v1092
        %1094 = vmatmul.bf16.gmra.mxu0 %v462
        %v1095 = vpop.f32.mrf.mxu0
        %v1096 = vadd.f32 %v1007, %v1095
        %v1097 = vpop.f32.mrf.mxu0
        %v1098 = vadd.f32 %v1009, %v1097
        %1099 = vmatmul.bf16.gmra.mxu0 %v464
        %v1100 = vpop.f32.mrf.mxu0
        %v1101 = vadd.f32 %v1012, %v1100
        %v1102 = vpop.f32.mrf.mxu0
        %v1103 = vadd.f32 %v1014, %v1102
        %1104 = vmatmul.bf16.gmra.mxu0 %v466
        %v1105 = vpop.f32.mrf.mxu0
        %v1106 = vadd.f32 %v1017, %v1105
        %v1107 = vpop.f32.mrf.mxu0
        %v1108 = vadd.f32 %v1019, %v1107
        %1109 = vmatmul.bf16.gmra.mxu0 %v468
        %v1110 = vpop.f32.mrf.mxu0
        %v1111 = vadd.f32 %v1022, %v1110
        %v1112 = vpop.f32.mrf.mxu0
        %v1113 = vadd.f32 %v1024, %v1112
        %1114 = vmatmul.bf16.gmra.mxu0 %v470
        %v1115 = vpop.f32.mrf.mxu0
        %v1116 = vadd.f32 %v1027, %v1115
        %v1117 = vpop.f32.mrf.mxu0
        %v1118 = vadd.f32 %v1029, %v1117
        %1119 = vmatmul.bf16.gmra.mxu0 %v472
        %v1120 = vpop.f32.mrf.mxu0
        %v1121 = vadd.f32 %v1032, %v1120
        %v1122 = vpop.f32.mrf.mxu0
        %v1123 = vadd.f32 %v1034, %v1122
        %1124 = vmatmul.bf16.gmra.mxu0 %v474
        %v1125 = vpop.f32.mrf.mxu0
        %v1126 = vadd.f32 %v1037, %v1125
        %v1127 = vpop.f32.mrf.mxu0
        %v1128 = vadd.f32 %v1039, %v1127
        %1129 = vmatmul.bf16.gmra.mxu0 %v476
        %v1130 = vpop.f32.mrf.mxu0
        %v1131 = vadd.f32 %v1042, %v1130
        %v1132 = vpop.f32.mrf.mxu0
        %v1133 = vadd.f32 %v1044, %v1132
        %1134 = vdwg.mxu0
        %1135 = vmatpush.bf16.msra.mxu0 %v908
        %1136 = vmatpush.bf16.msra.mxu0 %v906
        %1137 = vmatpush.bf16.msra.mxu0 %v904
        %1138 = vmatpush.bf16.msra.mxu0 %v902
        %1139 = vmatpush.bf16.msra.mxu0 %v900
        %1140 = vmatpush.bf16.msra.mxu0 %v898
        %1141 = vmatpush.bf16.msra.mxu0 %v896
        %1142 = vmatpush.bf16.msra.mxu0 %v894
        %1143 = vmatmul.bf16.gmra.mxu0 %v445
        %v1144 = vpop.f32.mrf.mxu0
        %v1145 = vadd.f32 %v718, %v1144
        %v1146 = vpop.f32.mrf.mxu0
        %v1147 = vadd.f32 %v720, %v1146
        %1148 = vmatmul.bf16.gmra.mxu0 %v447
        %v1149 = vpop.f32.mrf.mxu0
        %v1150 = vadd.f32 %v723, %v1149
        %v1151 = vpop.f32.mrf.mxu0
        %v1152 = vadd.f32 %v725, %v1151
        %1153 = vmatmul.bf16.gmra.mxu0 %v449
        %v1154 = vpop.f32.mrf.mxu0
        %v1155 = vadd.f32 %v728, %v1154
        %v1156 = vpop.f32.mrf.mxu0
        %v1157 = vadd.f32 %v730, %v1156
        %1158 = vmatmul.bf16.gmra.mxu0 %v451
        %v1159 = vpop.f32.mrf.mxu0
        %v1160 = vadd.f32 %v733, %v1159
        %v1161 = vpop.f32.mrf.mxu0
        %v1162 = vadd.f32 %v735, %v1161
        %1163 = vmatmul.bf16.gmra.mxu0 %v453
        %v1164 = vpop.f32.mrf.mxu0
        %v1165 = vadd.f32 %v738, %v1164
        %v1166 = vpop.f32.mrf.mxu0
        %v1167 = vadd.f32 %v740, %v1166
        %1168 = vmatmul.bf16.gmra.mxu0 %v455
        %v1169 = vpop.f32.mrf.mxu0
        %v1170 = vadd.f32 %v743, %v1169
        %v1171 = vpop.f32.mrf.mxu0
        %v1172 = vadd.f32 %v745, %v1171
        %1173 = vmatmul.bf16.gmra.mxu0 %v457
        %v1174 = vpop.f32.mrf.mxu0
        %v1175 = vadd.f32 %v748, %v1174
        %v1176 = vpop.f32.mrf.mxu0
        %v1177 = vadd.f32 %v750, %v1176
        %1178 = vmatmul.bf16.gmra.mxu0 %v459
        %v1179 = vpop.f32.mrf.mxu0
        %v1180 = vadd.f32 %v753, %v1179
        %v1181 = vpop.f32.mrf.mxu0
        %v1182 = vadd.f32 %v755, %v1181
        %1183 = vmatmul.bf16.gmra.mxu0 %v461
        %v1184 = vpop.f32.mrf.mxu0
        %v1185 = vadd.f32 %v758, %v1184
        %v1186 = vpop.f32.mrf.mxu0
        %v1187 = vadd.f32 %v760, %v1186
        %1188 = vmatmul.bf16.gmra.mxu0 %v463
        %v1189 = vpop.f32.mrf.mxu0
        %v1190 = vadd.f32 %v763, %v1189
        %v1191 = vpop.f32.mrf.mxu0
        %v1192 = vadd.f32 %v765, %v1191
        %1193 = vmatmul.bf16.gmra.mxu0 %v465
        %v1194 = vpop.f32.mrf.mxu0
        %v1195 = vadd.f32 %v768, %v1194
        %v1196 = vpop.f32.mrf.mxu0
        %v1197 = vadd.f32 %v770, %v1196
        %1198 = vmatmul.bf16.gmra.mxu0 %v467
        %v1199 = vpop.f32.mrf.mxu0
        %v1200 = vadd.f32 %v773, %v1199
        %v1201 = vpop.f32.mrf.mxu0
        %v1202 = vadd.f32 %v775, %v1201
        %1203 = vmatmul.bf16.gmra.mxu0 %v469
        %v1204 = vpop.f32.mrf.mxu0
        %v1205 = vadd.f32 %v778, %v1204
        %v1206 = vpop.f32.mrf.mxu0
        %v1207 = vadd.f32 %v780, %v1206
        %1208 = vmatmul.bf16.gmra.mxu0 %v471
        %v1209 = vpop.f32.mrf.mxu0
        %v1210 = vadd.f32 %v783, %v1209
        %v1211 = vpop.f32.mrf.mxu0
        %v1212 = vadd.f32 %v785, %v1211
        %1213 = vmatmul.bf16.gmra.mxu0 %v473
        %v1214 = vpop.f32.mrf.mxu0
        %v1215 = vadd.f32 %v788, %v1214
        %v1216 = vpop.f32.mrf.mxu0
        %v1217 = vadd.f32 %v790, %v1216
        %1218 = vmatmul.bf16.gmra.mxu0 %v475
        %v1219 = vpop.f32.mrf.mxu0
        %v1220 = vadd.f32 %v793, %v1219
        %v1221 = vpop.f32.mrf.mxu0
        %v1222 = vadd.f32 %v795, %v1221
        %1223 = vdwg.mxu0
        %1224 = vmatpush.bf16.msra.mxu0 %v924
        %1225 = vmatpush.bf16.msra.mxu0 %v922
        %1226 = vmatpush.bf16.msra.mxu0 %v920
        %1227 = vmatpush.bf16.msra.mxu0 %v918
        %1228 = vmatpush.bf16.msra.mxu0 %v916
        %1229 = vmatpush.bf16.msra.mxu0 %v914
        %1230 = vmatpush.bf16.msra.mxu0 %v912
        %1231 = vmatpush.bf16.msra.mxu0 %v910
        %1232 = vmatmul.bf16.gmra.mxu0 %v446
        %v1233 = vpop.f32.mrf.mxu0
        %v1234 = vadd.f32 %v1145, %v1233
        %v1235 = vpop.f32.mrf.mxu0
        %v1236 = vadd.f32 %v1147, %v1235
        %1237 = vmatmul.bf16.gmra.mxu0 %v448
        %v1238 = vpop.f32.mrf.mxu0
        %v1239 = vadd.f32 %v1150, %v1238
        %v1240 = vpop.f32.mrf.mxu0
        %v1241 = vadd.f32 %v1152, %v1240
        %1242 = vmatmul.bf16.gmra.mxu0 %v450
        %v1243 = vpop.f32.mrf.mxu0
        %v1244 = vadd.f32 %v1155, %v1243
        %v1245 = vpop.f32.mrf.mxu0
        %v1246 = vadd.f32 %v1157, %v1245
        %1247 = vmatmul.bf16.gmra.mxu0 %v452
        %v1248 = vpop.f32.mrf.mxu0
        %v1249 = vadd.f32 %v1160, %v1248
        %v1250 = vpop.f32.mrf.mxu0
        %v1251 = vadd.f32 %v1162, %v1250
        %1252 = vmatmul.bf16.gmra.mxu0 %v454
        %v1253 = vpop.f32.mrf.mxu0
        %v1254 = vadd.f32 %v1165, %v1253
        %v1255 = vpop.f32.mrf.mxu0
        %v1256 = vadd.f32 %v1167, %v1255
        %1257 = vmatmul.bf16.gmra.mxu0 %v456
        %v1258 = vpop.f32.mrf.mxu0
        %v1259 = vadd.f32 %v1170, %v1258
        %v1260 = vpop.f32.mrf.mxu0
        %v1261 = vadd.f32 %v1172, %v1260
        %1262 = vmatmul.bf16.gmra.mxu0 %v458
        %v1263 = vpop.f32.mrf.mxu0
        %v1264 = vadd.f32 %v1175, %v1263
        %v1265 = vpop.f32.mrf.mxu0
        %v1266 = vadd.f32 %v1177, %v1265
        %1267 = vmatmul.bf16.gmra.mxu0 %v460
        %v1268 = vpop.f32.mrf.mxu0
        %v1269 = vadd.f32 %v1180, %v1268
        %v1270 = vpop.f32.mrf.mxu0
        %v1271 = vadd.f32 %v1182, %v1270
        %1272 = vmatmul.bf16.gmra.mxu0 %v462
        %v1273 = vpop.f32.mrf.mxu0
        %v1274 = vadd.f32 %v1185, %v1273
        %v1275 = vpop.f32.mrf.mxu0
        %v1276 = vadd.f32 %v1187, %v1275
        %1277 = vmatmul.bf16.gmra.mxu0 %v464
        %v1278 = vpop.f32.mrf.mxu0
        %v1279 = vadd.f32 %v1190, %v1278
        %v1280 = vpop.f32.mrf.mxu0
        %v1281 = vadd.f32 %v1192, %v1280
        %1282 = vmatmul.bf16.gmra.mxu0 %v466
        %v1283 = vpop.f32.mrf.mxu0
        %v1284 = vadd.f32 %v1195, %v1283
        %v1285 = vpop.f32.mrf.mxu0
        %v1286 = vadd.f32 %v1197, %v1285
        %1287 = vmatmul.bf16.gmra.mxu0 %v468
        %v1288 = vpop.f32.mrf.mxu0
        %v1289 = vadd.f32 %v1200, %v1288
        %v1290 = vpop.f32.mrf.mxu0
        %v1291 = vadd.f32 %v1202, %v1290
        %1292 = vmatmul.bf16.gmra.mxu0 %v470
        %v1293 = vpop.f32.mrf.mxu0
        %v1294 = vadd.f32 %v1205, %v1293
        %v1295 = vpop.f32.mrf.mxu0
        %v1296 = vadd.f32 %v1207, %v1295
        %1297 = vmatmul.bf16.gmra.mxu0 %v472
        %v1298 = vpop.f32.mrf.mxu0
        %v1299 = vadd.f32 %v1210, %v1298
        %v1300 = vpop.f32.mrf.mxu0
        %v1301 = vadd.f32 %v1212, %v1300
        %1302 = vmatmul.bf16.gmra.mxu0 %v474
        %v1303 = vpop.f32.mrf.mxu0
        %v1304 = vadd.f32 %v1215, %v1303
        %v1305 = vpop.f32.mrf.mxu0
        %v1306 = vadd.f32 %v1217, %v1305
        %1307 = vmatmul.bf16.gmra.mxu0 %v476
        %v1308 = vpop.f32.mrf.mxu0
        %v1309 = vadd.f32 %v1220, %v1308
        %v1310 = vpop.f32.mrf.mxu0
        %v1311 = vadd.f32 %v1222, %v1310
        %1312 = vdwg.mxu0
        %v1313 = vld [vmem:[%s4] sm:$0x3]
        %v1315 = vperm.slane %v1313, 0
        %v1316 = vperm.slane %v1313, 1
        %v1319 = vadd.f32 %v1056, %v1315
        %v1320 = vadd.f32 %v1234, %v1316
        %v1321 = vadd.f32 %v1058, %v1315
        %v1322 = vadd.f32 %v1236, %v1316
        %v1323 = vadd.f32 %v1061, %v1315
        %v1324 = vadd.f32 %v1239, %v1316
        %v1325 = vadd.f32 %v1063, %v1315
        %v1326 = vadd.f32 %v1241, %v1316
        %v1327 = vadd.f32 %v1066, %v1315
        %v1328 = vadd.f32 %v1244, %v1316
        %v1329 = vadd.f32 %v1068, %v1315
        %v1330 = vadd.f32 %v1246, %v1316
        %v1331 = vadd.f32 %v1071, %v1315
        %v1332 = vadd.f32 %v1249, %v1316
        %v1333 = vadd.f32 %v1073, %v1315
        %v1334 = vadd.f32 %v1251, %v1316
        %v1335 = vadd.f32 %v1076, %v1315
        %v1336 = vadd.f32 %v1254, %v1316
        %v1337 = vadd.f32 %v1078, %v1315
        %v1338 = vadd.f32 %v1256, %v1316
        %v1339 = vadd.f32 %v1081, %v1315
        %v1340 = vadd.f32 %v1259, %v1316
        %v1341 = vadd.f32 %v1083, %v1315
        %v1342 = vadd.f32 %v1261, %v1316
        %v1343 = vadd.f32 %v1086, %v1315
        %v1344 = vadd.f32 %v1264, %v1316
        %v1345 = vadd.f32 %v1088, %v1315
        %v1346 = vadd.f32 %v1266, %v1316
        %v1347 = vadd.f32 %v1091, %v1315
        %v1348 = vadd.f32 %v1269, %v1316
        %v1349 = vadd.f32 %v1093, %v1315
        %v1350 = vadd.f32 %v1271, %v1316
        %v1351 = vadd.f32 %v1096, %v1315
        %v1352 = vadd.f32 %v1274, %v1316
        %v1353 = vadd.f32 %v1098, %v1315
        %v1354 = vadd.f32 %v1276, %v1316
        %v1355 = vadd.f32 %v1101, %v1315
        %v1356 = vadd.f32 %v1279, %v1316
        %v1357 = vadd.f32 %v1103, %v1315
        %v1358 = vadd.f32 %v1281, %v1316
        %v1359 = vadd.f32 %v1106, %v1315
        %v1360 = vadd.f32 %v1284, %v1316
        %v1361 = vadd.f32 %v1108, %v1315
        %v1362 = vadd.f32 %v1286, %v1316
        %v1363 = vadd.f32 %v1111, %v1315
        %v1364 = vadd.f32 %v1289, %v1316
        %v1365 = vadd.f32 %v1113, %v1315
        %v1366 = vadd.f32 %v1291, %v1316
        %v1367 = vadd.f32 %v1116, %v1315
        %v1368 = vadd.f32 %v1294, %v1316
        %v1369 = vadd.f32 %v1118, %v1315
        %v1370 = vadd.f32 %v1296, %v1316
        %v1371 = vadd.f32 %v1121, %v1315
        %v1372 = vadd.f32 %v1299, %v1316
        %v1373 = vadd.f32 %v1123, %v1315
        %v1374 = vadd.f32 %v1301, %v1316
        %v1375 = vadd.f32 %v1126, %v1315
        %v1376 = vadd.f32 %v1304, %v1316
        %v1377 = vadd.f32 %v1128, %v1315
        %v1378 = vadd.f32 %v1306, %v1316
        %v1379 = vadd.f32 %v1131, %v1315
        %v1380 = vadd.f32 %v1309, %v1316
        %v1381 = vadd.f32 %v1133, %v1315
        %v1382 = vadd.f32 %v1311, %v1316
        %v1383 = vmax.f32 %v1319, 0.0
        %v1384 = vmax.f32 %v1320, 0.0
        %v1385 = vmax.f32 %v1321, 0.0
        %v1386 = vmax.f32 %v1322, 0.0
        %v1387 = vmax.f32 %v1323, 0.0
        %v1388 = vmax.f32 %v1324, 0.0
        %v1389 = vmax.f32 %v1325, 0.0
        %v1390 = vmax.f32 %v1326, 0.0
        %v1391 = vmax.f32 %v1327, 0.0
        %v1392 = vmax.f32 %v1328, 0.0
        %v1393 = vmax.f32 %v1329, 0.0
        %v1394 = vmax.f32 %v1330, 0.0
        %v1395 = vmax.f32 %v1331, 0.0
        %v1396 = vmax.f32 %v1332, 0.0
        %v1397 = vmax.f32 %v1333, 0.0
        %v1398 = vmax.f32 %v1334, 0.0
        %v1399 = vmax.f32 %v1335, 0.0
        %v1400 = vmax.f32 %v1336, 0.0
        %v1401 = vmax.f32 %v1337, 0.0
        %v1402 = vmax.f32 %v1338, 0.0
        %v1403 = vmax.f32 %v1339, 0.0
        %v1404 = vmax.f32 %v1340, 0.0
        %v1405 = vmax.f32 %v1341, 0.0
        %v1406 = vmax.f32 %v1342, 0.0
        %v1407 = vmax.f32 %v1343, 0.0
        %v1408 = vmax.f32 %v1344, 0.0
        %v1409 = vmax.f32 %v1345, 0.0
        %v1410 = vmax.f32 %v1346, 0.0
        %v1411 = vmax.f32 %v1347, 0.0
        %v1412 = vmax.f32 %v1348, 0.0
        %v1413 = vmax.f32 %v1349, 0.0
        %v1414 = vmax.f32 %v1350, 0.0
        %v1415 = vmax.f32 %v1351, 0.0
        %v1416 = vmax.f32 %v1352, 0.0
        %v1417 = vmax.f32 %v1353, 0.0
        %v1418 = vmax.f32 %v1354, 0.0
        %v1419 = vmax.f32 %v1355, 0.0
        %v1420 = vmax.f32 %v1356, 0.0
        %v1421 = vmax.f32 %v1357, 0.0
        %v1422 = vmax.f32 %v1358, 0.0
        %v1423 = vmax.f32 %v1359, 0.0
        %v1424 = vmax.f32 %v1360, 0.0
        %v1425 = vmax.f32 %v1361, 0.0
        %v1426 = vmax.f32 %v1362, 0.0
        %v1427 = vmax.f32 %v1363, 0.0
        %v1428 = vmax.f32 %v1364, 0.0
        %v1429 = vmax.f32 %v1365, 0.0
        %v1430 = vmax.f32 %v1366, 0.0
        %v1431 = vmax.f32 %v1367, 0.0
        %v1432 = vmax.f32 %v1368, 0.0
        %v1433 = vmax.f32 %v1369, 0.0
        %v1434 = vmax.f32 %v1370, 0.0
        %v1435 = vmax.f32 %v1371, 0.0
        %v1436 = vmax.f32 %v1372, 0.0
        %v1437 = vmax.f32 %v1373, 0.0
        %v1438 = vmax.f32 %v1374, 0.0
        %v1439 = vmax.f32 %v1375, 0.0
        %v1440 = vmax.f32 %v1376, 0.0
        %v1441 = vmax.f32 %v1377, 0.0
        %v1442 = vmax.f32 %v1378, 0.0
        %v1443 = vmax.f32 %v1379, 0.0
        %v1444 = vmax.f32 %v1380, 0.0
        %v1445 = vmax.f32 %v1381, 0.0
        %v1446 = vmax.f32 %v1382, 0.0
        %v1447 = vpack.c.bf16 %v1385, %v1383
        %v1448 = vpack.c.bf16 %v1386, %v1384
        %v1449 = vpack.c.bf16 %v1389, %v1387
        %v1450 = vpack.c.bf16 %v1390, %v1388
        %v1451 = vpack.c.bf16 %v1393, %v1391
        %v1452 = vpack.c.bf16 %v1394, %v1392
        %v1453 = vpack.c.bf16 %v1397, %v1395
        %v1454 = vpack.c.bf16 %v1398, %v1396
        %v1455 = vpack.c.bf16 %v1401, %v1399
        %v1456 = vpack.c.bf16 %v1402, %v1400
        %v1457 = vpack.c.bf16 %v1405, %v1403
        %v1458 = vpack.c.bf16 %v1406, %v1404
        %v1459 = vpack.c.bf16 %v1409, %v1407
        %v1460 = vpack.c.bf16 %v1410, %v1408
        %v1461 = vpack.c.bf16 %v1413, %v1411
        %v1462 = vpack.c.bf16 %v1414, %v1412
        %v1463 = vpack.c.bf16 %v1417, %v1415
        %v1464 = vpack.c.bf16 %v1418, %v1416
        %v1465 = vpack.c.bf16 %v1421, %v1419
        %v1466 = vpack.c.bf16 %v1422, %v1420
        %v1467 = vpack.c.bf16 %v1425, %v1423
        %v1468 = vpack.c.bf16 %v1426, %v1424
        %v1469 = vpack.c.bf16 %v1429, %v1427
        %v1470 = vpack.c.bf16 %v1430, %v1428
        %v1471 = vpack.c.bf16 %v1433, %v1431
        %v1472 = vpack.c.bf16 %v1434, %v1432
        %v1473 = vpack.c.bf16 %v1437, %v1435
        %v1474 = vpack.c.bf16 %v1438, %v1436
        %v1475 = vpack.c.bf16 %v1441, %v1439
        %v1476 = vpack.c.bf16 %v1442, %v1440
        %v1477 = vpack.c.bf16 %v1445, %v1443
        %v1478 = vpack.c.bf16 %v1446, %v1444
        %v1479 = vld [vmem:[%s5] sm:$0xff]
        %v1480 = vld [vmem:[%s5 + $0x8] sm:$0xff]
        %v1481 = vld [vmem:[%s5 + $0x10] sm:$0xff]
        %v1482 = vld [vmem:[%s5 + $0x18] sm:$0xff]
        %v1483 = vld [vmem:[%s5 + $0x20] sm:$0xff]
        %v1484 = vld [vmem:[%s5 + $0x28] sm:$0xff]
        %v1485 = vld [vmem:[%s5 + $0x30] sm:$0xff]
        %v1486 = vld [vmem:[%s5 + $0x38] sm:$0xff]
        %v1487 = vld [vmem:[%s5 + $0x40] sm:$0xff]
        %v1488 = vld [vmem:[%s5 + $0x48] sm:$0xff]
        %v1489 = vld [vmem:[%s5 + $0x50] sm:$0xff]
        %v1490 = vld [vmem:[%s5 + $0x58] sm:$0xff]
        %v1491 = vld [vmem:[%s5 + $0x60] sm:$0xff]
        %v1492 = vld [vmem:[%s5 + $0x68] sm:$0xff]
        %v1493 = vld [vmem:[%s5 + $0x70] sm:$0xff]
        %v1494 = vld [vmem:[%s5 + $0x78] sm:$0xff]
        %v1495 = vld [vmem:[%s5 + $0x80] sm:$0xff]
        %v1496 = vld [vmem:[%s5 + $0x88] sm:$0xff]
        %v1497 = vld [vmem:[%s5 + $0x90] sm:$0xff]
        %v1498 = vld [vmem:[%s5 + $0x98] sm:$0xff]
        %v1499 = vld [vmem:[%s5 + $0xa0] sm:$0xff]
        %v1500 = vld [vmem:[%s5 + $0xa8] sm:$0xff]
        %v1501 = vld [vmem:[%s5 + $0xb0] sm:$0xff]
        %v1502 = vld [vmem:[%s5 + $0xb8] sm:$0xff]
        %v1503 = vld [vmem:[%s5 + $0xc0] sm:$0xff]
        %v1504 = vld [vmem:[%s5 + $0xc8] sm:$0xff]
        %v1505 = vld [vmem:[%s5 + $0xd0] sm:$0xff]
        %v1506 = vld [vmem:[%s5 + $0xd8] sm:$0xff]
        %v1507 = vld [vmem:[%s5 + $0xe0] sm:$0xff]
        %v1508 = vld [vmem:[%s5 + $0xe8] sm:$0xff]
        %v1509 = vld [vmem:[%s5 + $0xf0] sm:$0xff]
        %v1510 = vld [vmem:[%s5 + $0xf8] sm:$0xff]
        %v1511 = vld [vmem:[%s6] sm:$0x3]
        %v1513 = vperm.slane %v1511, 0
        %v1514 = vperm.slane %v1511, 1
        %v1549 = vunpack.c.l.b16 %v1479
        %v1550 = vunpack.c.h.b16 %v1479
        %v1551 = vunpack.c.l.b16 %v1480
        %v1552 = vunpack.c.h.b16 %v1480
        %v1553 = vunpack.c.l.b16 %v1481
        %v1554 = vunpack.c.h.b16 %v1481
        %v1555 = vunpack.c.l.b16 %v1482
        %v1556 = vunpack.c.h.b16 %v1482
        %v1557 = vunpack.c.l.b16 %v1483
        %v1558 = vunpack.c.h.b16 %v1483
        %v1559 = vunpack.c.l.b16 %v1484
        %v1560 = vunpack.c.h.b16 %v1484
        %v1561 = vunpack.c.l.b16 %v1485
        %v1562 = vunpack.c.h.b16 %v1485
        %v1563 = vunpack.c.l.b16 %v1486
        %v1564 = vunpack.c.h.b16 %v1486
        %v1565 = vunpack.c.l.b16 %v1487
        %v1566 = vunpack.c.h.b16 %v1487
        %v1567 = vunpack.c.l.b16 %v1488
        %v1568 = vunpack.c.h.b16 %v1488
        %v1569 = vunpack.c.l.b16 %v1489
        %v1570 = vunpack.c.h.b16 %v1489
        %v1571 = vunpack.c.l.b16 %v1490
        %v1572 = vunpack.c.h.b16 %v1490
        %v1573 = vunpack.c.l.b16 %v1491
        %v1574 = vunpack.c.h.b16 %v1491
        %v1575 = vunpack.c.l.b16 %v1492
        %v1576 = vunpack.c.h.b16 %v1492
        %v1577 = vunpack.c.l.b16 %v1493
        %v1578 = vunpack.c.h.b16 %v1493
        %v1579 = vunpack.c.l.b16 %v1494
        %v1580 = vunpack.c.h.b16 %v1494
        %v1581 = vunpack.c.l.b16 %v1495
        %v1582 = vunpack.c.h.b16 %v1495
        %v1583 = vunpack.c.l.b16 %v1496
        %v1584 = vunpack.c.h.b16 %v1496
        %v1585 = vunpack.c.l.b16 %v1497
        %v1586 = vunpack.c.h.b16 %v1497
        %v1587 = vunpack.c.l.b16 %v1498
        %v1588 = vunpack.c.h.b16 %v1498
        %v1589 = vunpack.c.l.b16 %v1499
        %v1590 = vunpack.c.h.b16 %v1499
        %v1591 = vunpack.c.l.b16 %v1500
        %v1592 = vunpack.c.h.b16 %v1500
        %v1593 = vunpack.c.l.b16 %v1501
        %v1594 = vunpack.c.h.b16 %v1501
        %v1595 = vunpack.c.l.b16 %v1502
        %v1596 = vunpack.c.h.b16 %v1502
        %v1597 = vunpack.c.l.b16 %v1503
        %v1598 = vunpack.c.h.b16 %v1503
        %v1599 = vunpack.c.l.b16 %v1504
        %v1600 = vunpack.c.h.b16 %v1504
        %v1601 = vunpack.c.l.b16 %v1505
        %v1602 = vunpack.c.h.b16 %v1505
        %v1603 = vunpack.c.l.b16 %v1506
        %v1604 = vunpack.c.h.b16 %v1506
        %v1605 = vunpack.c.l.b16 %v1507
        %v1606 = vunpack.c.h.b16 %v1507
        %v1607 = vunpack.c.l.b16 %v1508
        %v1608 = vunpack.c.h.b16 %v1508
        %v1609 = vunpack.c.l.b16 %v1509
        %v1610 = vunpack.c.h.b16 %v1509
        %v1611 = vunpack.c.l.b16 %v1510
        %v1612 = vunpack.c.h.b16 %v1510
        %v1613 = vpack.c.b16 %v1551, %v1549
        %v1614 = vpack.c.b16 %v1552, %v1550
        %v1615 = vpack.c.b16 %v1555, %v1553
        %v1616 = vpack.c.b16 %v1556, %v1554
        %v1617 = vpack.c.b16 %v1559, %v1557
        %v1618 = vpack.c.b16 %v1560, %v1558
        %v1619 = vpack.c.b16 %v1563, %v1561
        %v1620 = vpack.c.b16 %v1564, %v1562
        %v1621 = vpack.c.b16 %v1567, %v1565
        %v1622 = vpack.c.b16 %v1568, %v1566
        %v1623 = vpack.c.b16 %v1571, %v1569
        %v1624 = vpack.c.b16 %v1572, %v1570
        %v1625 = vpack.c.b16 %v1575, %v1573
        %v1626 = vpack.c.b16 %v1576, %v1574
        %v1627 = vpack.c.b16 %v1579, %v1577
        %v1628 = vpack.c.b16 %v1580, %v1578
        %v1629 = vpack.c.b16 %v1583, %v1581
        %v1630 = vpack.c.b16 %v1584, %v1582
        %v1631 = vpack.c.b16 %v1587, %v1585
        %v1632 = vpack.c.b16 %v1588, %v1586
        %v1633 = vpack.c.b16 %v1591, %v1589
        %v1634 = vpack.c.b16 %v1592, %v1590
        %v1635 = vpack.c.b16 %v1595, %v1593
        %v1636 = vpack.c.b16 %v1596, %v1594
        %v1637 = vpack.c.b16 %v1599, %v1597
        %v1638 = vpack.c.b16 %v1600, %v1598
        %v1639 = vpack.c.b16 %v1603, %v1601
        %v1640 = vpack.c.b16 %v1604, %v1602
        %v1641 = vpack.c.b16 %v1607, %v1605
        %v1642 = vpack.c.b16 %v1608, %v1606
        %v1643 = vpack.c.b16 %v1611, %v1609
        %v1644 = vpack.c.b16 %v1612, %v1610
        %1677 = vmatpush.bf16.msra.mxu0 %v1627
        %1678 = vmatpush.bf16.msra.mxu0 %v1625
        %1679 = vmatpush.bf16.msra.mxu0 %v1623
        %1680 = vmatpush.bf16.msra.mxu0 %v1621
        %1681 = vmatpush.bf16.msra.mxu0 %v1619
        %1682 = vmatpush.bf16.msra.mxu0 %v1617
        %1683 = vmatpush.bf16.msra.mxu0 %v1615
        %1684 = vmatpush.bf16.msra.mxu0 %v1613
        %1685 = vmatmul.bf16.gmra.mxu0 %v1447
        %v1686 = vpop.f32.mrf.mxu0
        %v1687 = vadd.f32 %v1513, %v1686
        %v1688 = vpop.f32.mrf.mxu0
        %v1689 = vadd.f32 %v1513, %v1688
        %1690 = vmatmul.bf16.gmra.mxu0 %v1449
        %v1691 = vpop.f32.mrf.mxu0
        %v1692 = vadd.f32 %v1513, %v1691
        %v1693 = vpop.f32.mrf.mxu0
        %v1694 = vadd.f32 %v1513, %v1693
        %1695 = vmatmul.bf16.gmra.mxu0 %v1451
        %v1696 = vpop.f32.mrf.mxu0
        %v1697 = vadd.f32 %v1513, %v1696
        %v1698 = vpop.f32.mrf.mxu0
        %v1699 = vadd.f32 %v1513, %v1698
        %1700 = vmatmul.bf16.gmra.mxu0 %v1453
        %v1701 = vpop.f32.mrf.mxu0
        %v1702 = vadd.f32 %v1513, %v1701
        %v1703 = vpop.f32.mrf.mxu0
        %v1704 = vadd.f32 %v1513, %v1703
        %1705 = vmatmul.bf16.gmra.mxu0 %v1455
        %v1706 = vpop.f32.mrf.mxu0
        %v1707 = vadd.f32 %v1513, %v1706
        %v1708 = vpop.f32.mrf.mxu0
        %v1709 = vadd.f32 %v1513, %v1708
        %1710 = vmatmul.bf16.gmra.mxu0 %v1457
        %v1711 = vpop.f32.mrf.mxu0
        %v1712 = vadd.f32 %v1513, %v1711
        %v1713 = vpop.f32.mrf.mxu0
        %v1714 = vadd.f32 %v1513, %v1713
        %1715 = vmatmul.bf16.gmra.mxu0 %v1459
        %v1716 = vpop.f32.mrf.mxu0
        %v1717 = vadd.f32 %v1513, %v1716
        %v1718 = vpop.f32.mrf.mxu0
        %v1719 = vadd.f32 %v1513, %v1718
        %1720 = vmatmul.bf16.gmra.mxu0 %v1461
        %v1721 = vpop.f32.mrf.mxu0
        %v1722 = vadd.f32 %v1513, %v1721
        %v1723 = vpop.f32.mrf.mxu0
        %v1724 = vadd.f32 %v1513, %v1723
        %1725 = vmatmul.bf16.gmra.mxu0 %v1463
        %v1726 = vpop.f32.mrf.mxu0
        %v1727 = vadd.f32 %v1513, %v1726
        %v1728 = vpop.f32.mrf.mxu0
        %v1729 = vadd.f32 %v1513, %v1728
        %1730 = vmatmul.bf16.gmra.mxu0 %v1465
        %v1731 = vpop.f32.mrf.mxu0
        %v1732 = vadd.f32 %v1513, %v1731
        %v1733 = vpop.f32.mrf.mxu0
        %v1734 = vadd.f32 %v1513, %v1733
        %1735 = vmatmul.bf16.gmra.mxu0 %v1467
        %v1736 = vpop.f32.mrf.mxu0
        %v1737 = vadd.f32 %v1513, %v1736
        %v1738 = vpop.f32.mrf.mxu0
        %v1739 = vadd.f32 %v1513, %v1738
        %1740 = vmatmul.bf16.gmra.mxu0 %v1469
        %v1741 = vpop.f32.mrf.mxu0
        %v1742 = vadd.f32 %v1513, %v1741
        %v1743 = vpop.f32.mrf.mxu0
        %v1744 = vadd.f32 %v1513, %v1743
        %1745 = vmatmul.bf16.gmra.mxu0 %v1471
        %v1746 = vpop.f32.mrf.mxu0
        %v1747 = vadd.f32 %v1513, %v1746
        %v1748 = vpop.f32.mrf.mxu0
        %v1749 = vadd.f32 %v1513, %v1748
        %1750 = vmatmul.bf16.gmra.mxu0 %v1473
        %v1751 = vpop.f32.mrf.mxu0
        %v1752 = vadd.f32 %v1513, %v1751
        %v1753 = vpop.f32.mrf.mxu0
        %v1754 = vadd.f32 %v1513, %v1753
        %1755 = vmatmul.bf16.gmra.mxu0 %v1475
        %v1756 = vpop.f32.mrf.mxu0
        %v1757 = vadd.f32 %v1513, %v1756
        %v1758 = vpop.f32.mrf.mxu0
        %v1759 = vadd.f32 %v1513, %v1758
        %1760 = vmatmul.bf16.gmra.mxu0 %v1477
        %v1761 = vpop.f32.mrf.mxu0
        %v1762 = vadd.f32 %v1513, %v1761
        %v1763 = vpop.f32.mrf.mxu0
        %v1764 = vadd.f32 %v1513, %v1763
        %1765 = vdwg.mxu0
        %1766 = vmatpush.bf16.msra.mxu0 %v1643
        %1767 = vmatpush.bf16.msra.mxu0 %v1641
        %1768 = vmatpush.bf16.msra.mxu0 %v1639
        %1769 = vmatpush.bf16.msra.mxu0 %v1637
        %1770 = vmatpush.bf16.msra.mxu0 %v1635
        %1771 = vmatpush.bf16.msra.mxu0 %v1633
        %1772 = vmatpush.bf16.msra.mxu0 %v1631
        %1773 = vmatpush.bf16.msra.mxu0 %v1629
        %1774 = vmatmul.bf16.gmra.mxu0 %v1448
        %v1775 = vpop.f32.mrf.mxu0
        %v1776 = vadd.f32 %v1687, %v1775
        %v1777 = vpop.f32.mrf.mxu0
        %v1778 = vadd.f32 %v1689, %v1777
        %1779 = vmatmul.bf16.gmra.mxu0 %v1450
        %v1780 = vpop.f32.mrf.mxu0
        %v1781 = vadd.f32 %v1692, %v1780
        %v1782 = vpop.f32.mrf.mxu0
        %v1783 = vadd.f32 %v1694, %v1782
        %1784 = vmatmul.bf16.gmra.mxu0 %v1452
        %v1785 = vpop.f32.mrf.mxu0
        %v1786 = vadd.f32 %v1697, %v1785
        %v1787 = vpop.f32.mrf.mxu0
        %v1788 = vadd.f32 %v1699, %v1787
        %1789 = vmatmul.bf16.gmra.mxu0 %v1454
        %v1790 = vpop.f32.mrf.mxu0
        %v1791 = vadd.f32 %v1702, %v1790
        %v1792 = vpop.f32.mrf.mxu0
        %v1793 = vadd.f32 %v1704, %v1792
        %1794 = vmatmul.bf16.gmra.mxu0 %v1456
        %v1795 = vpop.f32.mrf.mxu0
        %v1796 = vadd.f32 %v1707, %v1795
        %v1797 = vpop.f32.mrf.mxu0
        %v1798 = vadd.f32 %v1709, %v1797
        %1799 = vmatmul.bf16.gmra.mxu0 %v1458
        %v1800 = vpop.f32.mrf.mxu0
        %v1801 = vadd.f32 %v1712, %v1800
        %v1802 = vpop.f32.mrf.mxu0
        %v1803 = vadd.f32 %v1714, %v1802
        %1804 = vmatmul.bf16.gmra.mxu0 %v1460
        %v1805 = vpop.f32.mrf.mxu0
        %v1806 = vadd.f32 %v1717, %v1805
        %v1807 = vpop.f32.mrf.mxu0
        %v1808 = vadd.f32 %v1719, %v1807
        %1809 = vmatmul.bf16.gmra.mxu0 %v1462
        %v1810 = vpop.f32.mrf.mxu0
        %v1811 = vadd.f32 %v1722, %v1810
        %v1812 = vpop.f32.mrf.mxu0
        %v1813 = vadd.f32 %v1724, %v1812
        %1814 = vmatmul.bf16.gmra.mxu0 %v1464
        %v1815 = vpop.f32.mrf.mxu0
        %v1816 = vadd.f32 %v1727, %v1815
        %v1817 = vpop.f32.mrf.mxu0
        %v1818 = vadd.f32 %v1729, %v1817
        %1819 = vmatmul.bf16.gmra.mxu0 %v1466
        %v1820 = vpop.f32.mrf.mxu0
        %v1821 = vadd.f32 %v1732, %v1820
        %v1822 = vpop.f32.mrf.mxu0
        %v1823 = vadd.f32 %v1734, %v1822
        %1824 = vmatmul.bf16.gmra.mxu0 %v1468
        %v1825 = vpop.f32.mrf.mxu0
        %v1826 = vadd.f32 %v1737, %v1825
        %v1827 = vpop.f32.mrf.mxu0
        %v1828 = vadd.f32 %v1739, %v1827
        %1829 = vmatmul.bf16.gmra.mxu0 %v1470
        %v1830 = vpop.f32.mrf.mxu0
        %v1831 = vadd.f32 %v1742, %v1830
        %v1832 = vpop.f32.mrf.mxu0
        %v1833 = vadd.f32 %v1744, %v1832
        %1834 = vmatmul.bf16.gmra.mxu0 %v1472
        %v1835 = vpop.f32.mrf.mxu0
        %v1836 = vadd.f32 %v1747, %v1835
        %v1837 = vpop.f32.mrf.mxu0
        %v1838 = vadd.f32 %v1749, %v1837
        %1839 = vmatmul.bf16.gmra.mxu0 %v1474
        %v1840 = vpop.f32.mrf.mxu0
        %v1841 = vadd.f32 %v1752, %v1840
        %v1842 = vpop.f32.mrf.mxu0
        %v1843 = vadd.f32 %v1754, %v1842
        %1844 = vmatmul.bf16.gmra.mxu0 %v1476
        %v1845 = vpop.f32.mrf.mxu0
        %v1846 = vadd.f32 %v1757, %v1845
        %v1847 = vpop.f32.mrf.mxu0
        %v1848 = vadd.f32 %v1759, %v1847
        %1849 = vmatmul.bf16.gmra.mxu0 %v1478
        %v1850 = vpop.f32.mrf.mxu0
        %v1851 = vadd.f32 %v1762, %v1850
        %v1852 = vpop.f32.mrf.mxu0
        %v1853 = vadd.f32 %v1764, %v1852
        %1854 = vdwg.mxu0
        %1855 = vmatpush.bf16.msra.mxu0 %v1628
        %1856 = vmatpush.bf16.msra.mxu0 %v1626
        %1857 = vmatpush.bf16.msra.mxu0 %v1624
        %1858 = vmatpush.bf16.msra.mxu0 %v1622
        %1859 = vmatpush.bf16.msra.mxu0 %v1620
        %1860 = vmatpush.bf16.msra.mxu0 %v1618
        %1861 = vmatpush.bf16.msra.mxu0 %v1616
        %1862 = vmatpush.bf16.msra.mxu0 %v1614
        %1863 = vmatmul.bf16.gmra.mxu0 %v1447
        %v1864 = vpop.f32.mrf.mxu0
        %v1865 = vadd.f32 %v1514, %v1864
        %v1866 = vpop.f32.mrf.mxu0
        %v1867 = vadd.f32 %v1514, %v1866
        %1868 = vmatmul.bf16.gmra.mxu0 %v1449
        %v1869 = vpop.f32.mrf.mxu0
        %v1870 = vadd.f32 %v1514, %v1869
        %v1871 = vpop.f32.mrf.mxu0
        %v1872 = vadd.f32 %v1514, %v1871
        %1873 = vmatmul.bf16.gmra.mxu0 %v1451
        %v1874 = vpop.f32.mrf.mxu0
        %v1875 = vadd.f32 %v1514, %v1874
        %v1876 = vpop.f32.mrf.mxu0
        %v1877 = vadd.f32 %v1514, %v1876
        %1878 = vmatmul.bf16.gmra.mxu0 %v1453
        %v1879 = vpop.f32.mrf.mxu0
        %v1880 = vadd.f32 %v1514, %v1879
        %v1881 = vpop.f32.mrf.mxu0
        %v1882 = vadd.f32 %v1514, %v1881
        %1883 = vmatmul.bf16.gmra.mxu0 %v1455
        %v1884 = vpop.f32.mrf.mxu0
        %v1885 = vadd.f32 %v1514, %v1884
        %v1886 = vpop.f32.mrf.mxu0
        %v1887 = vadd.f32 %v1514, %v1886
        %1888 = vmatmul.bf16.gmra.mxu0 %v1457
        %v1889 = vpop.f32.mrf.mxu0
        %v1890 = vadd.f32 %v1514, %v1889
        %v1891 = vpop.f32.mrf.mxu0
        %v1892 = vadd.f32 %v1514, %v1891
        %1893 = vmatmul.bf16.gmra.mxu0 %v1459
        %v1894 = vpop.f32.mrf.mxu0
        %v1895 = vadd.f32 %v1514, %v1894
        %v1896 = vpop.f32.mrf.mxu0
        %v1897 = vadd.f32 %v1514, %v1896
        %1898 = vmatmul.bf16.gmra.mxu0 %v1461
        %v1899 = vpop.f32.mrf.mxu0
        %v1900 = vadd.f32 %v1514, %v1899
        %v1901 = vpop.f32.mrf.mxu0
        %v1902 = vadd.f32 %v1514, %v1901
        %1903 = vmatmul.bf16.gmra.mxu0 %v1463
        %v1904 = vpop.f32.mrf.mxu0
        %v1905 = vadd.f32 %v1514, %v1904
        %v1906 = vpop.f32.mrf.mxu0
        %v1907 = vadd.f32 %v1514, %v1906
        %1908 = vmatmul.bf16.gmra.mxu0 %v1465
        %v1909 = vpop.f32.mrf.mxu0
        %v1910 = vadd.f32 %v1514, %v1909
        %v1911 = vpop.f32.mrf.mxu0
        %v1912 = vadd.f32 %v1514, %v1911
        %1913 = vmatmul.bf16.gmra.mxu0 %v1467
        %v1914 = vpop.f32.mrf.mxu0
        %v1915 = vadd.f32 %v1514, %v1914
        %v1916 = vpop.f32.mrf.mxu0
        %v1917 = vadd.f32 %v1514, %v1916
        %1918 = vmatmul.bf16.gmra.mxu0 %v1469
        %v1919 = vpop.f32.mrf.mxu0
        %v1920 = vadd.f32 %v1514, %v1919
        %v1921 = vpop.f32.mrf.mxu0
        %v1922 = vadd.f32 %v1514, %v1921
        %1923 = vmatmul.bf16.gmra.mxu0 %v1471
        %v1924 = vpop.f32.mrf.mxu0
        %v1925 = vadd.f32 %v1514, %v1924
        %v1926 = vpop.f32.mrf.mxu0
        %v1927 = vadd.f32 %v1514, %v1926
        %1928 = vmatmul.bf16.gmra.mxu0 %v1473
        %v1929 = vpop.f32.mrf.mxu0
        %v1930 = vadd.f32 %v1514, %v1929
        %v1931 = vpop.f32.mrf.mxu0
        %v1932 = vadd.f32 %v1514, %v1931
        %1933 = vmatmul.bf16.gmra.mxu0 %v1475
        %v1934 = vpop.f32.mrf.mxu0
        %v1935 = vadd.f32 %v1514, %v1934
        %v1936 = vpop.f32.mrf.mxu0
        %v1937 = vadd.f32 %v1514, %v1936
        %1938 = vmatmul.bf16.gmra.mxu0 %v1477
        %v1939 = vpop.f32.mrf.mxu0
        %v1940 = vadd.f32 %v1514, %v1939
        %v1941 = vpop.f32.mrf.mxu0
        %v1942 = vadd.f32 %v1514, %v1941
        %1943 = vdwg.mxu0
        %1944 = vmatpush.bf16.msra.mxu0 %v1644
        %1945 = vmatpush.bf16.msra.mxu0 %v1642
        %1946 = vmatpush.bf16.msra.mxu0 %v1640
        %1947 = vmatpush.bf16.msra.mxu0 %v1638
        %1948 = vmatpush.bf16.msra.mxu0 %v1636
        %1949 = vmatpush.bf16.msra.mxu0 %v1634
        %1950 = vmatpush.bf16.msra.mxu0 %v1632
        %1951 = vmatpush.bf16.msra.mxu0 %v1630
        %1952 = vmatmul.bf16.gmra.mxu0 %v1448
        %v1953 = vpop.f32.mrf.mxu0
        %v1954 = vadd.f32 %v1865, %v1953
        %v1955 = vpop.f32.mrf.mxu0
        %v1956 = vadd.f32 %v1867, %v1955
        %1957 = vmatmul.bf16.gmra.mxu0 %v1450
        %v1958 = vpop.f32.mrf.mxu0
        %v1959 = vadd.f32 %v1870, %v1958
        %v1960 = vpop.f32.mrf.mxu0
        %v1961 = vadd.f32 %v1872, %v1960
        %1962 = vmatmul.bf16.gmra.mxu0 %v1452
        %v1963 = vpop.f32.mrf.mxu0
        %v1964 = vadd.f32 %v1875, %v1963
        %v1965 = vpop.f32.mrf.mxu0
        %v1966 = vadd.f32 %v1877, %v1965
        %1967 = vmatmul.bf16.gmra.mxu0 %v1454
        %v1968 = vpop.f32.mrf.mxu0
        %v1969 = vadd.f32 %v1880, %v1968
        %v1970 = vpop.f32.mrf.mxu0
        %v1971 = vadd.f32 %v1882, %v1970
        %1972 = vmatmul.bf16.gmra.mxu0 %v1456
        %v1973 = vpop.f32.mrf.mxu0
        %v1974 = vadd.f32 %v1885, %v1973
        %v1975 = vpop.f32.mrf.mxu0
        %v1976 = vadd.f32 %v1887, %v1975
        %1977 = vmatmul.bf16.gmra.mxu0 %v1458
        %v1978 = vpop.f32.mrf.mxu0
        %v1979 = vadd.f32 %v1890, %v1978
        %v1980 = vpop.f32.mrf.mxu0
        %v1981 = vadd.f32 %v1892, %v1980
        %1982 = vmatmul.bf16.gmra.mxu0 %v1460
        %v1983 = vpop.f32.mrf.mxu0
        %v1984 = vadd.f32 %v1895, %v1983
        %v1985 = vpop.f32.mrf.mxu0
        %v1986 = vadd.f32 %v1897, %v1985
        %1987 = vmatmul.bf16.gmra.mxu0 %v1462
        %v1988 = vpop.f32.mrf.mxu0
        %v1989 = vadd.f32 %v1900, %v1988
        %v1990 = vpop.f32.mrf.mxu0
        %v1991 = vadd.f32 %v1902, %v1990
        %1992 = vmatmul.bf16.gmra.mxu0 %v1464
        %v1993 = vpop.f32.mrf.mxu0
        %v1994 = vadd.f32 %v1905, %v1993
        %v1995 = vpop.f32.mrf.mxu0
        %v1996 = vadd.f32 %v1907, %v1995
        %1997 = vmatmul.bf16.gmra.mxu0 %v1466
        %v1998 = vpop.f32.mrf.mxu0
        %v1999 = vadd.f32 %v1910, %v1998
        %v2000 = vpop.f32.mrf.mxu0
        %v2001 = vadd.f32 %v1912, %v2000
        %2002 = vmatmul.bf16.gmra.mxu0 %v1468
        %v2003 = vpop.f32.mrf.mxu0
        %v2004 = vadd.f32 %v1915, %v2003
        %v2005 = vpop.f32.mrf.mxu0
        %v2006 = vadd.f32 %v1917, %v2005
        %2007 = vmatmul.bf16.gmra.mxu0 %v1470
        %v2008 = vpop.f32.mrf.mxu0
        %v2009 = vadd.f32 %v1920, %v2008
        %v2010 = vpop.f32.mrf.mxu0
        %v2011 = vadd.f32 %v1922, %v2010
        %2012 = vmatmul.bf16.gmra.mxu0 %v1472
        %v2013 = vpop.f32.mrf.mxu0
        %v2014 = vadd.f32 %v1925, %v2013
        %v2015 = vpop.f32.mrf.mxu0
        %v2016 = vadd.f32 %v1927, %v2015
        %2017 = vmatmul.bf16.gmra.mxu0 %v1474
        %v2018 = vpop.f32.mrf.mxu0
        %v2019 = vadd.f32 %v1930, %v2018
        %v2020 = vpop.f32.mrf.mxu0
        %v2021 = vadd.f32 %v1932, %v2020
        %2022 = vmatmul.bf16.gmra.mxu0 %v1476
        %v2023 = vpop.f32.mrf.mxu0
        %v2024 = vadd.f32 %v1935, %v2023
        %v2025 = vpop.f32.mrf.mxu0
        %v2026 = vadd.f32 %v1937, %v2025
        %2027 = vmatmul.bf16.gmra.mxu0 %v1478
        %v2028 = vpop.f32.mrf.mxu0
        %v2029 = vadd.f32 %v1940, %v2028
        %v2030 = vpop.f32.mrf.mxu0
        %v2031 = vadd.f32 %v1942, %v2030
        %2032 = vdwg.mxu0
        %v2033 = vmax.f32 %v1776, 0.0
        %v2034 = vmax.f32 %v1954, 0.0
        %v2035 = vmax.f32 %v1778, 0.0
        %v2036 = vmax.f32 %v1956, 0.0
        %v2037 = vmax.f32 %v1781, 0.0
        %v2038 = vmax.f32 %v1959, 0.0
        %v2039 = vmax.f32 %v1783, 0.0
        %v2040 = vmax.f32 %v1961, 0.0
        %v2041 = vmax.f32 %v1786, 0.0
        %v2042 = vmax.f32 %v1964, 0.0
        %v2043 = vmax.f32 %v1788, 0.0
        %v2044 = vmax.f32 %v1966, 0.0
        %v2045 = vmax.f32 %v1791, 0.0
        %v2046 = vmax.f32 %v1969, 0.0
        %v2047 = vmax.f32 %v1793, 0.0
        %v2048 = vmax.f32 %v1971, 0.0
        %v2049 = vmax.f32 %v1796, 0.0
        %v2050 = vmax.f32 %v1974, 0.0
        %v2051 = vmax.f32 %v1798, 0.0
        %v2052 = vmax.f32 %v1976, 0.0
        %v2053 = vmax.f32 %v1801, 0.0
        %v2054 = vmax.f32 %v1979, 0.0
        %v2055 = vmax.f32 %v1803, 0.0
        %v2056 = vmax.f32 %v1981, 0.0
        %v2057 = vmax.f32 %v1806, 0.0
        %v2058 = vmax.f32 %v1984, 0.0
        %v2059 = vmax.f32 %v1808, 0.0
        %v2060 = vmax.f32 %v1986, 0.0
        %v2061 = vmax.f32 %v1811, 0.0
        %v2062 = vmax.f32 %v1989, 0.0
        %v2063 = vmax.f32 %v1813, 0.0
        %v2064 = vmax.f32 %v1991, 0.0
        %v2065 = vmax.f32 %v1816, 0.0
        %v2066 = vmax.f32 %v1994, 0.0
        %v2067 = vmax.f32 %v1818, 0.0
        %v2068 = vmax.f32 %v1996, 0.0
        %v2069 = vmax.f32 %v1821, 0.0
        %v2070 = vmax.f32 %v1999, 0.0
        %v2071 = vmax.f32 %v1823, 0.0
        %v2072 = vmax.f32 %v2001, 0.0
        %v2073 = vmax.f32 %v1826, 0.0
        %v2074 = vmax.f32 %v2004, 0.0
        %v2075 = vmax.f32 %v1828, 0.0
        %v2076 = vmax.f32 %v2006, 0.0
        %v2077 = vmax.f32 %v1831, 0.0
        %v2078 = vmax.f32 %v2009, 0.0
        %v2079 = vmax.f32 %v1833, 0.0
        %v2080 = vmax.f32 %v2011, 0.0
        %v2081 = vmax.f32 %v1836, 0.0
        %v2082 = vmax.f32 %v2014, 0.0
        %v2083 = vmax.f32 %v1838, 0.0
        %v2084 = vmax.f32 %v2016, 0.0
        %v2085 = vmax.f32 %v1841, 0.0
        %v2086 = vmax.f32 %v2019, 0.0
        %v2087 = vmax.f32 %v1843, 0.0
        %v2088 = vmax.f32 %v2021, 0.0
        %v2089 = vmax.f32 %v1846, 0.0
        %v2090 = vmax.f32 %v2024, 0.0
        %v2091 = vmax.f32 %v1848, 0.0
        %v2092 = vmax.f32 %v2026, 0.0
        %v2093 = vmax.f32 %v1851, 0.0
        %v2094 = vmax.f32 %v2029, 0.0
        %v2095 = vmax.f32 %v1853, 0.0
        %v2096 = vmax.f32 %v2031, 0.0
        %v2097 = vpack.c.bf16 %v2035, %v2033
        %v2098 = vpack.c.bf16 %v2036, %v2034
        %v2099 = vpack.c.bf16 %v2039, %v2037
        %v2100 = vpack.c.bf16 %v2040, %v2038
        %v2101 = vpack.c.bf16 %v2043, %v2041
        %v2102 = vpack.c.bf16 %v2044, %v2042
        %v2103 = vpack.c.bf16 %v2047, %v2045
        %v2104 = vpack.c.bf16 %v2048, %v2046
        %v2105 = vpack.c.bf16 %v2051, %v2049
        %v2106 = vpack.c.bf16 %v2052, %v2050
        %v2107 = vpack.c.bf16 %v2055, %v2053
        %v2108 = vpack.c.bf16 %v2056, %v2054
        %v2109 = vpack.c.bf16 %v2059, %v2057
        %v2110 = vpack.c.bf16 %v2060, %v2058
        %v2111 = vpack.c.bf16 %v2063, %v2061
        %v2112 = vpack.c.bf16 %v2064, %v2062
        %v2113 = vpack.c.bf16 %v2067, %v2065
        %v2114 = vpack.c.bf16 %v2068, %v2066
        %v2115 = vpack.c.bf16 %v2071, %v2069
        %v2116 = vpack.c.bf16 %v2072, %v2070
        %v2117 = vpack.c.bf16 %v2075, %v2073
        %v2118 = vpack.c.bf16 %v2076, %v2074
        %v2119 = vpack.c.bf16 %v2079, %v2077
        %v2120 = vpack.c.bf16 %v2080, %v2078
        %v2121 = vpack.c.bf16 %v2083, %v2081
        %v2122 = vpack.c.bf16 %v2084, %v2082
        %v2123 = vpack.c.bf16 %v2087, %v2085
        %v2124 = vpack.c.bf16 %v2088, %v2086
        %v2125 = vpack.c.bf16 %v2091, %v2089
        %v2126 = vpack.c.bf16 %v2092, %v2090
        %v2127 = vpack.c.bf16 %v2095, %v2093
        %v2128 = vpack.c.bf16 %v2096, %v2094
        %v2129 = vld [vmem:[%s7] sm:$0xf]
        %v2130 = vld [vmem:[%s7 + $0x4] sm:$0xf]
        %v2131 = vld [vmem:[%s7 + $0x8] sm:$0xf]
        %v2132 = vld [vmem:[%s7 + $0xc] sm:$0xf]
        %v2133 = vld [vmem:[%s7 + $0x10] sm:$0xf]
        %v2134 = vld [vmem:[%s7 + $0x14] sm:$0xf]
        %v2135 = vld [vmem:[%s7 + $0x18] sm:$0xf]
        %v2136 = vld [vmem:[%s7 + $0x1c] sm:$0xf]
        %v2137 = vld [vmem:[%s7 + $0x20] sm:$0xf]
        %v2138 = vld [vmem:[%s7 + $0x24] sm:$0xf]
        %v2139 = vld [vmem:[%s7 + $0x28] sm:$0xf]
        %v2140 = vld [vmem:[%s7 + $0x2c] sm:$0xf]
        %v2141 = vld [vmem:[%s7 + $0x30] sm:$0xf]
        %v2142 = vld [vmem:[%s7 + $0x34] sm:$0xf]
        %v2143 = vld [vmem:[%s7 + $0x38] sm:$0xf]
        %v2144 = vld [vmem:[%s7 + $0x3c] sm:$0xf]
        %v2145 = vld [vmem:[%s7 + $0x40] sm:$0xf]
        %v2146 = vld [vmem:[%s7 + $0x44] sm:$0xf]
        %v2147 = vld [vmem:[%s7 + $0x48] sm:$0xf]
        %v2148 = vld [vmem:[%s7 + $0x4c] sm:$0xf]
        %v2149 = vld [vmem:[%s7 + $0x50] sm:$0xf]
        %v2150 = vld [vmem:[%s7 + $0x54] sm:$0xf]
        %v2151 = vld [vmem:[%s7 + $0x58] sm:$0xf]
        %v2152 = vld [vmem:[%s7 + $0x5c] sm:$0xf]
        %v2153 = vld [vmem:[%s7 + $0x60] sm:$0xf]
        %v2154 = vld [vmem:[%s7 + $0x64] sm:$0xf]
        %v2155 = vld [vmem:[%s7 + $0x68] sm:$0xf]
        %v2156 = vld [vmem:[%s7 + $0x6c] sm:$0xf]
        %v2157 = vld [vmem:[%s7 + $0x70] sm:$0xf]
        %v2158 = vld [vmem:[%s7 + $0x74] sm:$0xf]
        %v2159 = vld [vmem:[%s7 + $0x78] sm:$0xf]
        %v2160 = vld [vmem:[%s7 + $0x7c] sm:$0xf]
        %v2161 = vld [vmem:[%s8] sm:$0x1]
        %v2163 = vperm.slane %v2161, 0
        %v2197 = vunpack.c.l.b16 %v2129
        %v2198 = vunpack.c.l.b16 %v2130
        %v2199 = vunpack.c.l.b16 %v2131
        %v2200 = vunpack.c.l.b16 %v2132
        %v2201 = vunpack.c.l.b16 %v2133
        %v2202 = vunpack.c.l.b16 %v2134
        %v2203 = vunpack.c.l.b16 %v2135
        %v2204 = vunpack.c.l.b16 %v2136
        %v2205 = vunpack.c.l.b16 %v2137
        %v2206 = vunpack.c.l.b16 %v2138
        %v2207 = vunpack.c.l.b16 %v2139
        %v2208 = vunpack.c.l.b16 %v2140
        %v2209 = vunpack.c.l.b16 %v2141
        %v2210 = vunpack.c.l.b16 %v2142
        %v2211 = vunpack.c.l.b16 %v2143
        %v2212 = vunpack.c.l.b16 %v2144
        %v2213 = vunpack.c.l.b16 %v2145
        %v2214 = vunpack.c.l.b16 %v2146
        %v2215 = vunpack.c.l.b16 %v2147
        %v2216 = vunpack.c.l.b16 %v2148
        %v2217 = vunpack.c.l.b16 %v2149
        %v2218 = vunpack.c.l.b16 %v2150
        %v2219 = vunpack.c.l.b16 %v2151
        %v2220 = vunpack.c.l.b16 %v2152
        %v2221 = vunpack.c.l.b16 %v2153
        %v2222 = vunpack.c.l.b16 %v2154
        %v2223 = vunpack.c.l.b16 %v2155
        %v2224 = vunpack.c.l.b16 %v2156
        %v2225 = vunpack.c.l.b16 %v2157
        %v2226 = vunpack.c.l.b16 %v2158
        %v2227 = vunpack.c.l.b16 %v2159
        %v2228 = vunpack.c.l.b16 %v2160
        %v2229 = vpack.c.b16 %v2198, %v2197
        %v2230 = vpack.c.b16 %v2200, %v2199
        %v2231 = vpack.c.b16 %v2202, %v2201
        %v2232 = vpack.c.b16 %v2204, %v2203
        %v2233 = vpack.c.b16 %v2206, %v2205
        %v2234 = vpack.c.b16 %v2208, %v2207
        %v2235 = vpack.c.b16 %v2210, %v2209
        %v2236 = vpack.c.b16 %v2212, %v2211
        %v2237 = vpack.c.b16 %v2214, %v2213
        %v2238 = vpack.c.b16 %v2216, %v2215
        %v2239 = vpack.c.b16 %v2218, %v2217
        %v2240 = vpack.c.b16 %v2220, %v2219
        %v2241 = vpack.c.b16 %v2222, %v2221
        %v2242 = vpack.c.b16 %v2224, %v2223
        %v2243 = vpack.c.b16 %v2226, %v2225
        %v2244 = vpack.c.b16 %v2228, %v2227
        %2261 = vmatpush.bf16.msra.mxu0 %v2236
        %2262 = vmatpush.bf16.msra.mxu0 %v2235
        %2263 = vmatpush.bf16.msra.mxu0 %v2234
        %2264 = vmatpush.bf16.msra.mxu0 %v2233
        %2265 = vmatpush.bf16.msra.mxu0 %v2232
        %2266 = vmatpush.bf16.msra.mxu0 %v2231
        %2267 = vmatpush.bf16.msra.mxu0 %v2230
        %2268 = vmatpush.bf16.msra.mxu0 %v2229
        %2269 = vmatmul.bf16.gmra.mxu0 %v2097
        %v2270 = vpop.f32.mrf.mxu0
        %v2271 = vadd.f32 %v2163, %v2270
        %v2272 = vpop.f32.mrf.mxu0
        %v2273 = vadd.f32 %v2163, %v2272
        %2274 = vmatmul.bf16.gmra.mxu0 %v2099
        %v2275 = vpop.f32.mrf.mxu0
        %v2276 = vadd.f32 %v2163, %v2275
        %v2277 = vpop.f32.mrf.mxu0
        %v2278 = vadd.f32 %v2163, %v2277
        %2279 = vmatmul.bf16.gmra.mxu0 %v2101
        %v2280 = vpop.f32.mrf.mxu0
        %v2281 = vadd.f32 %v2163, %v2280
        %v2282 = vpop.f32.mrf.mxu0
        %v2283 = vadd.f32 %v2163, %v2282
        %2284 = vmatmul.bf16.gmra.mxu0 %v2103
        %v2285 = vpop.f32.mrf.mxu0
        %v2286 = vadd.f32 %v2163, %v2285
        %v2287 = vpop.f32.mrf.mxu0
        %v2288 = vadd.f32 %v2163, %v2287
        %2289 = vmatmul.bf16.gmra.mxu0 %v2105
        %v2290 = vpop.f32.mrf.mxu0
        %v2291 = vadd.f32 %v2163, %v2290
        %v2292 = vpop.f32.mrf.mxu0
        %v2293 = vadd.f32 %v2163, %v2292
        %2294 = vmatmul.bf16.gmra.mxu0 %v2107
        %v2295 = vpop.f32.mrf.mxu0
        %v2296 = vadd.f32 %v2163, %v2295
        %v2297 = vpop.f32.mrf.mxu0
        %v2298 = vadd.f32 %v2163, %v2297
        %2299 = vmatmul.bf16.gmra.mxu0 %v2109
        %v2300 = vpop.f32.mrf.mxu0
        %v2301 = vadd.f32 %v2163, %v2300
        %v2302 = vpop.f32.mrf.mxu0
        %v2303 = vadd.f32 %v2163, %v2302
        %2304 = vmatmul.bf16.gmra.mxu0 %v2111
        %v2305 = vpop.f32.mrf.mxu0
        %v2306 = vadd.f32 %v2163, %v2305
        %v2307 = vpop.f32.mrf.mxu0
        %v2308 = vadd.f32 %v2163, %v2307
        %2309 = vmatmul.bf16.gmra.mxu0 %v2113
        %v2310 = vpop.f32.mrf.mxu0
        %v2311 = vadd.f32 %v2163, %v2310
        %v2312 = vpop.f32.mrf.mxu0
        %v2313 = vadd.f32 %v2163, %v2312
        %2314 = vmatmul.bf16.gmra.mxu0 %v2115
        %v2315 = vpop.f32.mrf.mxu0
        %v2316 = vadd.f32 %v2163, %v2315
        %v2317 = vpop.f32.mrf.mxu0
        %v2318 = vadd.f32 %v2163, %v2317
        %2319 = vmatmul.bf16.gmra.mxu0 %v2117
        %v2320 = vpop.f32.mrf.mxu0
        %v2321 = vadd.f32 %v2163, %v2320
        %v2322 = vpop.f32.mrf.mxu0
        %v2323 = vadd.f32 %v2163, %v2322
        %2324 = vmatmul.bf16.gmra.mxu0 %v2119
        %v2325 = vpop.f32.mrf.mxu0
        %v2326 = vadd.f32 %v2163, %v2325
        %v2327 = vpop.f32.mrf.mxu0
        %v2328 = vadd.f32 %v2163, %v2327
        %2329 = vmatmul.bf16.gmra.mxu0 %v2121
        %v2330 = vpop.f32.mrf.mxu0
        %v2331 = vadd.f32 %v2163, %v2330
        %v2332 = vpop.f32.mrf.mxu0
        %v2333 = vadd.f32 %v2163, %v2332
        %2334 = vmatmul.bf16.gmra.mxu0 %v2123
        %v2335 = vpop.f32.mrf.mxu0
        %v2336 = vadd.f32 %v2163, %v2335
        %v2337 = vpop.f32.mrf.mxu0
        %v2338 = vadd.f32 %v2163, %v2337
        %2339 = vmatmul.bf16.gmra.mxu0 %v2125
        %v2340 = vpop.f32.mrf.mxu0
        %v2341 = vadd.f32 %v2163, %v2340
        %v2342 = vpop.f32.mrf.mxu0
        %v2343 = vadd.f32 %v2163, %v2342
        %2344 = vmatmul.bf16.gmra.mxu0 %v2127
        %v2345 = vpop.f32.mrf.mxu0
        %v2346 = vadd.f32 %v2163, %v2345
        %v2347 = vpop.f32.mrf.mxu0
        %v2348 = vadd.f32 %v2163, %v2347
        %2349 = vdwg.mxu0
        %2350 = vmatpush.bf16.msra.mxu0 %v2244
        %2351 = vmatpush.bf16.msra.mxu0 %v2243
        %2352 = vmatpush.bf16.msra.mxu0 %v2242
        %2353 = vmatpush.bf16.msra.mxu0 %v2241
        %2354 = vmatpush.bf16.msra.mxu0 %v2240
        %2355 = vmatpush.bf16.msra.mxu0 %v2239
        %2356 = vmatpush.bf16.msra.mxu0 %v2238
        %2357 = vmatpush.bf16.msra.mxu0 %v2237
        %2358 = vmatmul.bf16.gmra.mxu0 %v2098
        %v2359 = vpop.f32.mrf.mxu0
        %v2360 = vadd.f32 %v2271, %v2359
        %v2361 = vpop.f32.mrf.mxu0
        %v2362 = vadd.f32 %v2273, %v2361
        %2363 = vmatmul.bf16.gmra.mxu0 %v2100
        %v2364 = vpop.f32.mrf.mxu0
        %v2365 = vadd.f32 %v2276, %v2364
        %v2366 = vpop.f32.mrf.mxu0
        %v2367 = vadd.f32 %v2278, %v2366
        %2368 = vmatmul.bf16.gmra.mxu0 %v2102
        %v2369 = vpop.f32.mrf.mxu0
        %v2370 = vadd.f32 %v2281, %v2369
        %v2371 = vpop.f32.mrf.mxu0
        %v2372 = vadd.f32 %v2283, %v2371
        %2373 = vmatmul.bf16.gmra.mxu0 %v2104
        %v2374 = vpop.f32.mrf.mxu0
        %v2375 = vadd.f32 %v2286, %v2374
        %v2376 = vpop.f32.mrf.mxu0
        %v2377 = vadd.f32 %v2288, %v2376
        %2378 = vmatmul.bf16.gmra.mxu0 %v2106
        %v2379 = vpop.f32.mrf.mxu0
        %v2380 = vadd.f32 %v2291, %v2379
        %v2381 = vpop.f32.mrf.mxu0
        %v2382 = vadd.f32 %v2293, %v2381
        %2383 = vmatmul.bf16.gmra.mxu0 %v2108
        %v2384 = vpop.f32.mrf.mxu0
        %v2385 = vadd.f32 %v2296, %v2384
        %v2386 = vpop.f32.mrf.mxu0
        %v2387 = vadd.f32 %v2298, %v2386
        %2388 = vmatmul.bf16.gmra.mxu0 %v2110
        %v2389 = vpop.f32.mrf.mxu0
        %v2390 = vadd.f32 %v2301, %v2389
        %v2391 = vpop.f32.mrf.mxu0
        %v2392 = vadd.f32 %v2303, %v2391
        %2393 = vmatmul.bf16.gmra.mxu0 %v2112
        %v2394 = vpop.f32.mrf.mxu0
        %v2395 = vadd.f32 %v2306, %v2394
        %v2396 = vpop.f32.mrf.mxu0
        %v2397 = vadd.f32 %v2308, %v2396
        %2398 = vmatmul.bf16.gmra.mxu0 %v2114
        %v2399 = vpop.f32.mrf.mxu0
        %v2400 = vadd.f32 %v2311, %v2399
        %v2401 = vpop.f32.mrf.mxu0
        %v2402 = vadd.f32 %v2313, %v2401
        %2403 = vmatmul.bf16.gmra.mxu0 %v2116
        %v2404 = vpop.f32.mrf.mxu0
        %v2405 = vadd.f32 %v2316, %v2404
        %v2406 = vpop.f32.mrf.mxu0
        %v2407 = vadd.f32 %v2318, %v2406
        %2408 = vmatmul.bf16.gmra.mxu0 %v2118
        %v2409 = vpop.f32.mrf.mxu0
        %v2410 = vadd.f32 %v2321, %v2409
        %v2411 = vpop.f32.mrf.mxu0
        %v2412 = vadd.f32 %v2323, %v2411
        %2413 = vmatmul.bf16.gmra.mxu0 %v2120
        %v2414 = vpop.f32.mrf.mxu0
        %v2415 = vadd.f32 %v2326, %v2414
        %v2416 = vpop.f32.mrf.mxu0
        %v2417 = vadd.f32 %v2328, %v2416
        %2418 = vmatmul.bf16.gmra.mxu0 %v2122
        %v2419 = vpop.f32.mrf.mxu0
        %v2420 = vadd.f32 %v2331, %v2419
        %v2421 = vpop.f32.mrf.mxu0
        %v2422 = vadd.f32 %v2333, %v2421
        %2423 = vmatmul.bf16.gmra.mxu0 %v2124
        %v2424 = vpop.f32.mrf.mxu0
        %v2425 = vadd.f32 %v2336, %v2424
        %v2426 = vpop.f32.mrf.mxu0
        %v2427 = vadd.f32 %v2338, %v2426
        %2428 = vmatmul.bf16.gmra.mxu0 %v2126
        %v2429 = vpop.f32.mrf.mxu0
        %v2430 = vadd.f32 %v2341, %v2429
        %v2431 = vpop.f32.mrf.mxu0
        %v2432 = vadd.f32 %v2343, %v2431
        %2433 = vmatmul.bf16.gmra.mxu0 %v2128
        %v2434 = vpop.f32.mrf.mxu0
        %v2435 = vadd.f32 %v2346, %v2434
        %v2436 = vpop.f32.mrf.mxu0
        %v2437 = vadd.f32 %v2348, %v2436
        %2438 = vdwg.mxu0
        %v2439 = vsub.f32 0.0, %v2360
        %v2440 = vsub.f32 0.0, %v2362
        %v2441 = vsub.f32 0.0, %v2365
        %v2442 = vsub.f32 0.0, %v2367
        %v2443 = vsub.f32 0.0, %v2370
        %v2444 = vsub.f32 0.0, %v2372
        %v2445 = vsub.f32 0.0, %v2375
        %v2446 = vsub.f32 0.0, %v2377
        %v2447 = vsub.f32 0.0, %v2380
        %v2448 = vsub.f32 0.0, %v2382
        %v2449 = vsub.f32 0.0, %v2385
        %v2450 = vsub.f32 0.0, %v2387
        %v2451 = vsub.f32 0.0, %v2390
        %v2452 = vsub.f32 0.0, %v2392
        %v2453 = vsub.f32 0.0, %v2395
        %v2454 = vsub.f32 0.0, %v2397
        %v2455 = vsub.f32 0.0, %v2400
        %v2456 = vsub.f32 0.0, %v2402
        %v2457 = vsub.f32 0.0, %v2405
        %v2458 = vsub.f32 0.0, %v2407
        %v2459 = vsub.f32 0.0, %v2410
        %v2460 = vsub.f32 0.0, %v2412
        %v2461 = vsub.f32 0.0, %v2415
        %v2462 = vsub.f32 0.0, %v2417
        %v2463 = vsub.f32 0.0, %v2420
        %v2464 = vsub.f32 0.0, %v2422
        %v2465 = vsub.f32 0.0, %v2425
        %v2466 = vsub.f32 0.0, %v2427
        %v2467 = vsub.f32 0.0, %v2430
        %v2468 = vsub.f32 0.0, %v2432
        %v2469 = vsub.f32 0.0, %v2435
        %v2470 = vsub.f32 0.0, %v2437
        %v2471 = vmul.f32 %v2439, 1.442695
        %v2472 = vpow.pop %v2471
        %v2473 = vmul.f32 %v2440, 1.442695
        %v2474 = vpow.pop %v2473
        %v2475 = vmul.f32 %v2441, 1.442695
        %v2476 = vpow.pop %v2475
        %v2477 = vmul.f32 %v2442, 1.442695
        %v2478 = vpow.pop %v2477
        %v2479 = vmul.f32 %v2443, 1.442695
        %v2480 = vpow.pop %v2479
        %v2481 = vmul.f32 %v2444, 1.442695
        %v2482 = vpow.pop %v2481
        %v2483 = vmul.f32 %v2445, 1.442695
        %v2484 = vpow.pop %v2483
        %v2485 = vmul.f32 %v2446, 1.442695
        %v2486 = vpow.pop %v2485
        %v2487 = vmul.f32 %v2447, 1.442695
        %v2488 = vpow.pop %v2487
        %v2489 = vmul.f32 %v2448, 1.442695
        %v2490 = vpow.pop %v2489
        %v2491 = vmul.f32 %v2449, 1.442695
        %v2492 = vpow.pop %v2491
        %v2493 = vmul.f32 %v2450, 1.442695
        %v2494 = vpow.pop %v2493
        %v2495 = vmul.f32 %v2451, 1.442695
        %v2496 = vpow.pop %v2495
        %v2497 = vmul.f32 %v2452, 1.442695
        %v2498 = vpow.pop %v2497
        %v2499 = vmul.f32 %v2453, 1.442695
        %v2500 = vpow.pop %v2499
        %v2501 = vmul.f32 %v2454, 1.442695
        %v2502 = vpow.pop %v2501
        %v2503 = vmul.f32 %v2455, 1.442695
        %v2504 = vpow.pop %v2503
        %v2505 = vmul.f32 %v2456, 1.442695
        %v2506 = vpow.pop %v2505
        %v2507 = vmul.f32 %v2457, 1.442695
        %v2508 = vpow.pop %v2507
        %v2509 = vmul.f32 %v2458, 1.442695
        %v2510 = vpow.pop %v2509
        %v2511 = vmul.f32 %v2459, 1.442695
        %v2512 = vpow.pop %v2511
        %v2513 = vmul.f32 %v2460, 1.442695
        %v2514 = vpow.pop %v2513
        %v2515 = vmul.f32 %v2461, 1.442695
        %v2516 = vpow.pop %v2515
        %v2517 = vmul.f32 %v2462, 1.442695
        %v2518 = vpow.pop %v2517
        %v2519 = vmul.f32 %v2463, 1.442695
        %v2520 = vpow.pop %v2519
        %v2521 = vmul.f32 %v2464, 1.442695
        %v2522 = vpow.pop %v2521
        %v2523 = vmul.f32 %v2465, 1.442695
        %v2524 = vpow.pop %v2523
        %v2525 = vmul.f32 %v2466, 1.442695
        %v2526 = vpow.pop %v2525
        %v2527 = vmul.f32 %v2467, 1.442695
        %v2528 = vpow.pop %v2527
        %v2529 = vmul.f32 %v2468, 1.442695
        %v2530 = vpow.pop %v2529
        %v2531 = vmul.f32 %v2469, 1.442695
        %v2532 = vpow.pop %v2531
        %v2533 = vmul.f32 %v2470, 1.442695
        %v2534 = vpow.pop %v2533
        %v2535 = vadd.f32 %v2472, 1.0
        %v2536 = vadd.f32 %v2474, 1.0
        %v2537 = vadd.f32 %v2476, 1.0
        %v2538 = vadd.f32 %v2478, 1.0
        %v2539 = vadd.f32 %v2480, 1.0
        %v2540 = vadd.f32 %v2482, 1.0
        %v2541 = vadd.f32 %v2484, 1.0
        %v2542 = vadd.f32 %v2486, 1.0
        %v2543 = vadd.f32 %v2488, 1.0
        %v2544 = vadd.f32 %v2490, 1.0
        %v2545 = vadd.f32 %v2492, 1.0
        %v2546 = vadd.f32 %v2494, 1.0
        %v2547 = vadd.f32 %v2496, 1.0
        %v2548 = vadd.f32 %v2498, 1.0
        %v2549 = vadd.f32 %v2500, 1.0
        %v2550 = vadd.f32 %v2502, 1.0
        %v2551 = vadd.f32 %v2504, 1.0
        %v2552 = vadd.f32 %v2506, 1.0
        %v2553 = vadd.f32 %v2508, 1.0
        %v2554 = vadd.f32 %v2510, 1.0
        %v2555 = vadd.f32 %v2512, 1.0
        %v2556 = vadd.f32 %v2514, 1.0
        %v2557 = vadd.f32 %v2516, 1.0
        %v2558 = vadd.f32 %v2518, 1.0
        %v2559 = vadd.f32 %v2520, 1.0
        %v2560 = vadd.f32 %v2522, 1.0
        %v2561 = vadd.f32 %v2524, 1.0
        %v2562 = vadd.f32 %v2526, 1.0
        %v2563 = vadd.f32 %v2528, 1.0
        %v2564 = vadd.f32 %v2530, 1.0
        %v2565 = vadd.f32 %v2532, 1.0
        %v2566 = vadd.f32 %v2534, 1.0
        %v2567 = vrcp.pop %v2535
        %v2568 = vrcp.pop %v2536
        %v2569 = vrcp.pop %v2537
        %v2570 = vrcp.pop %v2538
        %v2571 = vrcp.pop %v2539
        %v2572 = vrcp.pop %v2540
        %v2573 = vrcp.pop %v2541
        %v2574 = vrcp.pop %v2542
        %v2575 = vrcp.pop %v2543
        %v2576 = vrcp.pop %v2544
        %v2577 = vrcp.pop %v2545
        %v2578 = vrcp.pop %v2546
        %v2579 = vrcp.pop %v2547
        %v2580 = vrcp.pop %v2548
        %v2581 = vrcp.pop %v2549
        %v2582 = vrcp.pop %v2550
        %v2583 = vrcp.pop %v2551
        %v2584 = vrcp.pop %v2552
        %v2585 = vrcp.pop %v2553
        %v2586 = vrcp.pop %v2554
        %v2587 = vrcp.pop %v2555
        %v2588 = vrcp.pop %v2556
        %v2589 = vrcp.pop %v2557
        %v2590 = vrcp.pop %v2558
        %v2591 = vrcp.pop %v2559
        %v2592 = vrcp.pop %v2560
        %v2593 = vrcp.pop %v2561
        %v2594 = vrcp.pop %v2562
        %v2595 = vrcp.pop %v2563
        %v2596 = vrcp.pop %v2564
        %v2597 = vrcp.pop %v2565
        %v2598 = vrcp.pop %v2566
        %v2599 = vpack.c.bf16 %v2567, %v2567
        %v2600 = vpack.c.bf16 %v2568, %v2568
        %v2601 = vpack.c.bf16 %v2569, %v2569
        %v2602 = vpack.c.bf16 %v2570, %v2570
        %v2603 = vpack.c.bf16 %v2571, %v2571
        %v2604 = vpack.c.bf16 %v2572, %v2572
        %v2605 = vpack.c.bf16 %v2573, %v2573
        %v2606 = vpack.c.bf16 %v2574, %v2574
        %v2607 = vpack.c.bf16 %v2575, %v2575
        %v2608 = vpack.c.bf16 %v2576, %v2576
        %v2609 = vpack.c.bf16 %v2577, %v2577
        %v2610 = vpack.c.bf16 %v2578, %v2578
        %v2611 = vpack.c.bf16 %v2579, %v2579
        %v2612 = vpack.c.bf16 %v2580, %v2580
        %v2613 = vpack.c.bf16 %v2581, %v2581
        %v2614 = vpack.c.bf16 %v2582, %v2582
        %v2615 = vpack.c.bf16 %v2583, %v2583
        %v2616 = vpack.c.bf16 %v2584, %v2584
        %v2617 = vpack.c.bf16 %v2585, %v2585
        %v2618 = vpack.c.bf16 %v2586, %v2586
        %v2619 = vpack.c.bf16 %v2587, %v2587
        %v2620 = vpack.c.bf16 %v2588, %v2588
        %v2621 = vpack.c.bf16 %v2589, %v2589
        %v2622 = vpack.c.bf16 %v2590, %v2590
        %v2623 = vpack.c.bf16 %v2591, %v2591
        %v2624 = vpack.c.bf16 %v2592, %v2592
        %v2625 = vpack.c.bf16 %v2593, %v2593
        %v2626 = vpack.c.bf16 %v2594, %v2594
        %v2627 = vpack.c.bf16 %v2595, %v2595
        %v2628 = vpack.c.bf16 %v2596, %v2596
        %v2629 = vpack.c.bf16 %v2597, %v2597
        %v2630 = vpack.c.bf16 %v2598, %v2598
        %vm2631 = vcmask 19456
        %2632 = vst.msk [vmem:[%s378] sm:$0xf] %vm2631, %v2599
        %2633 = vst.msk [vmem:[%s378 + $0x4] sm:$0xf] %vm2631, %v2600
        %2634 = vst.msk [vmem:[%s378 + $0x8] sm:$0xf] %vm2631, %v2601
        %2635 = vst.msk [vmem:[%s378 + $0xc] sm:$0xf] %vm2631, %v2602
        %2636 = vst.msk [vmem:[%s378 + $0x10] sm:$0xf] %vm2631, %v2603
        %2637 = vst.msk [vmem:[%s378 + $0x14] sm:$0xf] %vm2631, %v2604
        %2638 = vst.msk [vmem:[%s378 + $0x18] sm:$0xf] %vm2631, %v2605
        %2639 = vst.msk [vmem:[%s378 + $0x1c] sm:$0xf] %vm2631, %v2606
        %2640 = vst.msk [vmem:[%s378 + $0x20] sm:$0xf] %vm2631, %v2607
        %2641 = vst.msk [vmem:[%s378 + $0x24] sm:$0xf] %vm2631, %v2608
        %2642 = vst.msk [vmem:[%s378 + $0x28] sm:$0xf] %vm2631, %v2609
        %2643 = vst.msk [vmem:[%s378 + $0x2c] sm:$0xf] %vm2631, %v2610
        %2644 = vst.msk [vmem:[%s378 + $0x30] sm:$0xf] %vm2631, %v2611
        %2645 = vst.msk [vmem:[%s378 + $0x34] sm:$0xf] %vm2631, %v2612
        %2646 = vst.msk [vmem:[%s378 + $0x38] sm:$0xf] %vm2631, %v2613
        %2647 = vst.msk [vmem:[%s378 + $0x3c] sm:$0xf] %vm2631, %v2614
        %2648 = vst.msk [vmem:[%s378 + $0x40] sm:$0xf] %vm2631, %v2615
        %2649 = vst.msk [vmem:[%s378 + $0x44] sm:$0xf] %vm2631, %v2616
        %2650 = vst.msk [vmem:[%s378 + $0x48] sm:$0xf] %vm2631, %v2617
        %2651 = vst.msk [vmem:[%s378 + $0x4c] sm:$0xf] %vm2631, %v2618
        %2652 = vst.msk [vmem:[%s378 + $0x50] sm:$0xf] %vm2631, %v2619
        %2653 = vst.msk [vmem:[%s378 + $0x54] sm:$0xf] %vm2631, %v2620
        %2654 = vst.msk [vmem:[%s378 + $0x58] sm:$0xf] %vm2631, %v2621
        %2655 = vst.msk [vmem:[%s378 + $0x5c] sm:$0xf] %vm2631, %v2622
        %2656 = vst.msk [vmem:[%s378 + $0x60] sm:$0xf] %vm2631, %v2623
        %2657 = vst.msk [vmem:[%s378 + $0x64] sm:$0xf] %vm2631, %v2624
        %2658 = vst.msk [vmem:[%s378 + $0x68] sm:$0xf] %vm2631, %v2625
        %2659 = vst.msk [vmem:[%s378 + $0x6c] sm:$0xf] %vm2631, %v2626
        %2660 = vst.msk [vmem:[%s378 + $0x70] sm:$0xf] %vm2631, %v2627
        %2661 = vst.msk [vmem:[%s378 + $0x74] sm:$0xf] %vm2631, %v2628
        %2662 = vst.msk [vmem:[%s378 + $0x78] sm:$0xf] %vm2631, %v2629
        %2663 = vst.msk [vmem:[%s378 + $0x7c] sm:$0xf] %vm2631, %v2630
        %s2664 = smul.u32 32, %s23
        %p2665 = scmp.lt.s32.totalorder %s2664, 127
        %s2666 = scalar_select %p2665, %s2664, 127
        %s2667 = smul.addr %s2666, 4
        %s2668 = scalar_lea.vmem %s9, %s2667
        // Predicated region
        $region61: #{renderingnet_pallas.1} parent=55 // pred_check
          %p2669 = pneg %p240
        $region62: #{renderingnet_pallas.1} parent=55 // pred_check_branch
          %2671 = sbr.rel (%p2669) target = $region64
        $region63: #{renderingnet_pallas.1} parent=55 // pred_region
          %s2672 = smul.u32 32, %s23
        $region64: #{renderingnet_pallas.1} parent=55 // pred_fallthru
          _
      $region56: #{renderingnet_pallas.1} parent=5 // pred_fallthru
        _
      %p2673 = scmp.le.s32.totalorder 2, %s18
      // Predicated region
      $region65: #{renderingnet_pallas.1} parent=5 // pred_check
        %p2674 = pneg %p2673
      $region66: #{renderingnet_pallas.1} parent=5 // pred_check_branch
        %2676 = sbr.rel (%p2674) target = $region68
      $region67: #{renderingnet_pallas.1} parent=5 // pred_region
        %s2677 = ssub.s32 %s18, 2
        // Predicated region
        $region69: #{renderingnet_pallas.1} parent=67 // pred_check
          %p2678 = pneg %p246
        $region70: #{renderingnet_pallas.1} parent=67 // pred_check_branch
          %2680 = sbr.rel (%p2678) target = $region72
        $region71: #{renderingnet_pallas.1} parent=67 // pred_region
          %s2681 = smul.u32 32, %s24
          %p2682 = scmp.lt.s32.totalorder %s2681, 127
          %s2683 = scalar_select %p2682, %s2681, 127
          %s2684 = smul.addr %s2683, 4
          %s2685 = scalar_lea.vmem %s9, %s2684
        $region72: #{renderingnet_pallas.1} parent=67 // pred_fallthru
          _
      $region68: #{renderingnet_pallas.1} parent=5 // pred_fallthru
        _
    $region6: #{renderingnet_pallas.1} parent=1 // loop_footer
      %s22 = sadd.s32 1, %s18
    $region7: #{renderingnet_pallas.1} parent=1 // loop_footer_branch
      %17 = sbr.rel target = $region3
    $region8: #{renderingnet_pallas.1} parent=1 // loop_exit
      _
    %2686 = vsyncpa [#allocation3], 1
    %s2687 = scalar_lea.sflag [#allocation3], 1
    %2688 = vsyncpa %s2687, 1

</llo_original>
